<compile_context>
chip_gen: v5e
topology: v5e:2x2
jax: 0.10.0
libtpu: 0.0.40
codegen_flags: <defaults>
</compile_context>

<pallas_src>
import math
import functools

import jax
import jax.numpy as jnp
from jax import lax
from jax.experimental import pallas as pl
from jax.experimental.pallas import tpu as pltpu

# ------------------------- config (LlamaArgs) -------------------------
VOCAB = 256
DIM = 32
N_LAYERS = 2
N_HEADS = 4
HEAD_DIM = DIM // N_HEADS
CONTEXT = 16
NORM_EPS = 1e-5
FFN_HIDDEN = 96  # llama-style 2/3 * 4 * DIM rounded up to a multiple of 32

_VMEM = pltpu.MemorySpace.VMEM
_SMEM = pltpu.MemorySpace.SMEM

# dot_general dims for y = x @ W.T with W stored (out, in): contract dim 1 of both.
_CONTRACT_IN = (((1,), (1,)), ((), ()))


# --------------------------- in-kernel helpers ---------------------------
def _rms(x, w, eps):
    # x: (rows, D) f32, w: (1, D) f32
    ms = jnp.mean(x * x, axis=-1, keepdims=True)
    return x * lax.rsqrt(ms + eps) * w


def _tb(x):
    # bf16 MXU operand (accumulation stays f32 via preferred_element_type)
    return x.astype(jnp.bfloat16)


def _rope(x, cos, sin, rot):
    # Interleaved complex-pair RoPE on a lane-dense (rows, H*hd) slab:
    #   out[..., 2j]   = x[2j]*cos_j - x[2j+1]*sin_j
    #   out[..., 2j+1] = x[2j]*sin_j + x[2j+1]*cos_j
    # partner lanes come from a (D, D) +/-1 permutation matmul (MXU), which is
    # exact and avoids cross-lane rolls.  cos/sin pre-expanded to (rows, D).
    partner = jnp.dot(x, rot, preferred_element_type=jnp.float32)
    return x * cos + partner * sin


# ------------------------------ kernels ------------------------------
def _block_kernel(h_ref, attn_norm_ref, wq_ref, wk_ref, wv_ref, wo_ref,
                  ffn_norm_ref, w1_ref, w2_ref, w3_ref,
                  cos_ref, sin_ref, rot_ref, o_ref,
                  *, n_heads, head_dim, eps, scale):
    # One batch element per program: h_ref is (T, D).
    h = h_ref[...].astype(jnp.float32)
    seq = h.shape[0]

    # ---- attention sub-block ----
    xn = _tb(_rms(h, attn_norm_ref[...], eps))
    q = lax.dot_general(xn, _tb(wq_ref[...]), _CONTRACT_IN,
                        preferred_element_type=jnp.float32)
    k = lax.dot_general(xn, _tb(wk_ref[...]), _CONTRACT_IN,
                        preferred_element_type=jnp.float32)
    v = lax.dot_general(xn, _tb(wv_ref[...]), _CONTRACT_IN,
                        preferred_element_type=jnp.float32)

    cos = cos_ref[...]
    sin = sin_ref[...]
    rot = rot_ref[...]
    q = _rope(q, cos, sin, rot)
    k = _rope(k, cos, sin, rot)

    row = lax.broadcasted_iota(jnp.int32, (seq, seq), 0)
    col = lax.broadcasted_iota(jnp.int32, (seq, seq), 1)
    causal = col <= row

    head_outs = []
    for hh in range(n_heads):          # static unroll, H=4 tiny heads
        lo = hh * head_dim
        qh = q[:, lo:lo + head_dim]
        kh = k[:, lo:lo + head_dim]
        vh = v[:, lo:lo + head_dim]
        s = lax.dot_general(qh, kh, _CONTRACT_IN,
                            preferred_element_type=jnp.float32) * scale
        s = jnp.where(causal, s, -jnp.inf)
        s = s - jnp.max(s, axis=-1, keepdims=True)
        p = jnp.exp(s)
        p = p * pl.reciprocal(jnp.sum(p, axis=-1, keepdims=True), approx=True)
        head_outs.append(jnp.dot(p, vh, preferred_element_type=jnp.float32))
    attn = jnp.concatenate(head_outs, axis=-1)          # (T, D)

    h = h + lax.dot_general(_tb(attn), _tb(wo_ref[...]), _CONTRACT_IN,
                            preferred_element_type=jnp.float32)

    # ---- feed-forward sub-block (SwiGLU) ----
    xn = _tb(_rms(h, ffn_norm_ref[...], eps))
    g = lax.dot_general(xn, _tb(w1_ref[...]), _CONTRACT_IN,
                        preferred_element_type=jnp.float32)
    u = lax.dot_general(xn, _tb(w2_ref[...]), _CONTRACT_IN,
                        preferred_element_type=jnp.float32)
    silu = g * pl.reciprocal(1.0 + jnp.exp(-g), approx=True)
    y = lax.dot_general(_tb(silu * u), _tb(w3_ref[...]), _CONTRACT_IN,
                        preferred_element_type=jnp.float32)
    o_ref[...] = (h + y).astype(o_ref.dtype)


def _head_kernel(h_ref, norm_ref, emb_ref, o_ref, *, eps):
    # Final RMSNorm + tied classifier fused: (T, D) -> (T, VOCAB).
    x = _tb(_rms(h_ref[...].astype(jnp.float32), norm_ref[...], eps))
    o_ref[...] = lax.dot_general(
        x, _tb(emb_ref[...]), _CONTRACT_IN,
        preferred_element_type=jnp.float32).astype(o_ref.dtype)


def _ce_kernel(logits_ref, labels_ref, loss_ref):
    # Stable mean cross-entropy; scalar result written to SMEM.
    logits = logits_ref[...].astype(jnp.float32)      # (N, V)
    labels = labels_ref[...]                          # (N, 1) int32
    n, v = logits.shape
    m = jnp.max(logits, axis=-1, keepdims=True)
    lse = m + jnp.log(jnp.sum(jnp.exp(logits - m), axis=-1, keepdims=True))
    cls = lax.broadcasted_iota(jnp.int32, (n, v), 1)
    tgt = jnp.sum(jnp.where(cls == labels, logits, 0.0), axis=-1, keepdims=True)
    loss_ref[0, 0] = jnp.sum(lse - tgt) * (1.0 / n)


# ------------------------------ wrappers ------------------------------
def transformer_block(h2d, p, cos, sin, rot, B, T):
    kern = functools.partial(_block_kernel, n_heads=N_HEADS, head_dim=HEAD_DIM,
                             eps=NORM_EPS, scale=1.0 / math.sqrt(HEAD_DIM))
    row = pl.BlockSpec((T, DIM), lambda b: (b, 0))

    def rep(shape):  # weight/table block: same block every grid step (no re-DMA)
        return pl.BlockSpec(shape, lambda b: (0, 0))

    return pl.pallas_call(
        kern,
        out_shape=jax.ShapeDtypeStruct((B * T, DIM), h2d.dtype),
        grid=(B,),
        in_specs=[row, rep((1, DIM)),
                  rep((DIM, DIM)), rep((DIM, DIM)), rep((DIM, DIM)), rep((DIM, DIM)),
                  rep((1, DIM)),
                  rep((FFN_HIDDEN, DIM)), rep((FFN_HIDDEN, DIM)), rep((DIM, FFN_HIDDEN)),
                  rep((T, DIM)), rep((T, DIM)), rep((DIM, DIM))],
        out_specs=row,
        input_output_aliases={0: 0},   # residual stream updated in place
        compiler_params=pltpu.CompilerParams(dimension_semantics=("parallel",)),
    )(h2d, p["attn_norm"], p["wq"], p["wk"], p["wv"], p["head_proj"],
      p["ffn_norm"], p["w1"], p["w2"], p["w3"], cos, sin, rot)


def lm_head(h2d, norm_w, emb, B, T):
    return pl.pallas_call(
        functools.partial(_head_kernel, eps=NORM_EPS),
        out_shape=jax.ShapeDtypeStruct((B * T, VOCAB), jnp.float32),
        grid=(B,),
        in_specs=[pl.BlockSpec((T, DIM), lambda b: (b, 0)),
                  pl.BlockSpec((1, DIM), lambda b: (0, 0)),
                  pl.BlockSpec((VOCAB, DIM), lambda b: (0, 0))],
        out_specs=pl.BlockSpec((T, VOCAB), lambda b: (b, 0)),
        compiler_params=pltpu.CompilerParams(dimension_semantics=("parallel",)),
    )(h2d, norm_w, emb)


def cross_entropy(logits2d, labels1d):
    # TODO(synk): at real vocab sizes fuse this with the classifier matmul using
    # chunked online logsumexp so full logits never hit HBM.
    loss = pl.pallas_call(
        _ce_kernel,
        out_shape=jax.ShapeDtypeStruct((1, 1), jnp.float32),
        in_specs=[pl.BlockSpec(memory_space=_VMEM),
                  pl.BlockSpec(memory_space=_VMEM)],
        out_specs=pl.BlockSpec(memory_space=_SMEM),
    )(logits2d, labels1d.reshape(-1, 1).astype(jnp.int32))
    return loss[0, 0]


# --------------------------- model plumbing ---------------------------
def precompute_freqs_cis(dim, end, theta=10000.0):
    freqs = 1.0 / (
        theta ** (jnp.arange(0, dim, 2, dtype=jnp.float32)[: dim // 2] / dim)
    )
    t = jnp.arange(end, dtype=jnp.float32)
    freqs = jnp.outer(t, freqs)
    return jnp.cos(freqs), jnp.sin(freqs)


def make_rope_rot():
    # (D, D) pair-swap / sign-flip matrix:  (x @ R)[2j] = -x[2j+1],
    # (x @ R)[2j+1] = x[2j].  Shared by every layer and head.
    idx = jnp.arange(DIM)
    sign = jnp.where(idx % 2 == 0, -1.0, 1.0).astype(jnp.float32)
    return jnp.zeros((DIM, DIM), jnp.float32).at[idx ^ 1, idx].set(sign)


def init_params(key):
    std = 0.02
    std_out = 0.02 / math.sqrt(2 * N_LAYERS)  # w3.weight / head_proj.weight
    keys = jax.random.split(key, 1 + N_LAYERS)
    emb = jax.random.normal(keys[0], (VOCAB, DIM), jnp.float32) * std  # tied classifier
    layers = []
    for i in range(N_LAYERS):
        lk = jax.random.split(keys[1 + i], 7)
        layers.append(dict(
            attn_norm=jnp.ones((1, DIM), jnp.float32),
            wq=jax.random.normal(lk[0], (DIM, DIM), jnp.float32) * std,
            wk=jax.random.normal(lk[1], (DIM, DIM), jnp.float32) * std,
            wv=jax.random.normal(lk[2], (DIM, DIM), jnp.float32) * std,
            head_proj=jax.random.normal(lk[3], (DIM, DIM), jnp.float32) * std_out,
            ffn_norm=jnp.ones((1, DIM), jnp.float32),
            w1=jax.random.normal(lk[4], (FFN_HIDDEN, DIM), jnp.float32) * std,
            w2=jax.random.normal(lk[5], (FFN_HIDDEN, DIM), jnp.float32) * std,
            w3=jax.random.normal(lk[6], (DIM, FFN_HIDDEN), jnp.float32) * std_out,
        ))
    return dict(emb=emb, layers=layers, final_norm=jnp.ones((1, DIM), jnp.float32))


@jax.jit
def forward(params, tokens, freqs_cos, freqs_sin, labels=None):
    B, T = tokens.shape
    # TODO(synk): embedding gather kept in plain JAX (data-dependent gather).
    h = jnp.take(params["emb"], tokens, axis=0)          # (B, T, D)
    # Expand RoPE tables to the lane-dense (T, D) layout once (pair-interleaved,
    # repeated per head) so the kernel needs no strided split/merge.
    cos = jnp.tile(jnp.repeat(freqs_cos[:T], 2, axis=-1), (1, N_HEADS))
    sin = jnp.tile(jnp.repeat(freqs_sin[:T], 2, axis=-1), (1, N_HEADS))
    rot = make_rope_rot()

    h2d = h.reshape(B * T, DIM)
    for p in params["layers"]:
        h2d = transformer_block(h2d, p, cos, sin, rot, B, T)  # one fused kernel/layer

    logits2d = lm_head(h2d, params["final_norm"], params["emb"], B, T)
    logits = logits2d.reshape(B, T, VOCAB)

    loss = None
    if labels is not None:
        loss = cross_entropy(logits2d, labels.reshape(-1))
    return logits, loss


if __name__ == "__main__":
    key = jax.random.PRNGKey(0)
    pk, tk, yk = jax.random.split(key, 3)
    params = init_params(pk)

    B, T = 2, 8
    tokens = jax.random.randint(tk, (B, T), 0, VOCAB, dtype=jnp.int32)
    labels = jax.random.randint(yk, (B, T), 0, VOCAB, dtype=jnp.int32)
    freqs_cos, freqs_sin = precompute_freqs_cis(HEAD_DIM, CONTEXT)

    logits, loss = forward(params, tokens, freqs_cos, freqs_sin, labels)
    jax.block_until_ready((logits, loss))
    assert logits.shape == (B, T, VOCAB)
    assert loss.shape == ()
    assert bool(jnp.isfinite(loss))
    print("KERNEL_OK")
</pallas_src>

<mosaic_0001>
module attributes {stable_mosaic.version = 11 : i64} {
  func.func @_head_kernel(%arg0: i32, %arg1: memref<8x32xf32, #tpu.memory_space<vmem>>, %arg2: memref<1x32xf32, #tpu.memory_space<vmem>>, %arg3: memref<256x32xf32, #tpu.memory_space<vmem>>, %arg4: memref<8x256xf32, #tpu.memory_space<vmem>>) attributes {dimension_semantics = [#tpu.dimension_semantics<parallel>], iteration_bounds = array<i64: 2>, scalar_prefetch = 0 : i64, scratch_operands = 0 : i64, tpu.core_type = #tpu.core_type<tc>, window_params = [{transform_indices = @transform_0, window_bounds = array<i64: 8, 32>}, {pipeline_mode = #tpu.pipeline_mode<synchronous>, transform_indices = @transform_1, window_bounds = array<i64: 1, 32>}, {pipeline_mode = #tpu.pipeline_mode<synchronous>, transform_indices = @transform_2, window_bounds = array<i64: 256, 32>}, {transform_indices = @transform_3, window_bounds = array<i64: 8, 256>}]} {
    %c0 = arith.constant 0 : index
    %c0_0 = arith.constant 0 : index
    %0 = vector.load %arg1[%c0, %c0_0] : memref<8x32xf32, #tpu.memory_space<vmem>>, vector<8x32xf32>
    %c0_1 = arith.constant 0 : index
    %c0_2 = arith.constant 0 : index
    %1 = vector.load %arg2[%c0_1, %c0_2] : memref<1x32xf32, #tpu.memory_space<vmem>>, vector<1x32xf32>
    %2 = arith.mulf %0, %0 : vector<8x32xf32>
    %cst = arith.constant dense<0.000000e+00> : vector<8xf32>
    %3 = vector.multi_reduction <add>, %2, %cst [1] : vector<8x32xf32> to vector<8xf32>
    %4 = vector.shape_cast %3 : vector<8xf32> to vector<8x1xf32>
    %cst_3 = arith.constant 3.200000e+01 : f32
    %5 = vector.broadcast %cst_3 : f32 to vector<8x1xf32>
    %6 = arith.divf %4, %5 : vector<8x1xf32>
    %cst_4 = arith.constant 9.99999974E-6 : f32
    %7 = vector.broadcast %cst_4 : f32 to vector<8x1xf32>
    %8 = arith.addf %6, %7 : vector<8x1xf32>
    %9 = math.rsqrt %8 : vector<8x1xf32>
    %10 = vector.broadcast %9 : vector<8x1xf32> to vector<8x32xf32>
    %11 = arith.mulf %0, %10 : vector<8x32xf32>
    %12 = vector.broadcast %1 : vector<1x32xf32> to vector<8x32xf32>
    %13 = arith.mulf %11, %12 : vector<8x32xf32>
    %14 = arith.truncf %13 : vector<8x32xf32> to vector<8x32xbf16>
    %c0_5 = arith.constant 0 : index
    %c0_6 = arith.constant 0 : index
    %15 = vector.load %arg3[%c0_5, %c0_6] : memref<256x32xf32, #tpu.memory_space<vmem>>, vector<256x32xf32>
    %16 = arith.truncf %15 : vector<256x32xf32> to vector<256x32xbf16>
    %cst_7 = arith.constant dense<0.000000e+00> : vector<8x256xf32>
    %17 = tpu.matmul %14, %16, %cst_7 {dimension_numbers = #tpu.dot_dimension_numbers<[1], [1], [0], [0], [0, 0, 1, 0], [], []>} : vector<8x32xbf16>, vector<256x32xbf16>, vector<8x256xf32> -> vector<8x256xf32>
    %c0_8 = arith.constant 0 : index
    %c0_9 = arith.constant 0 : index
    %18 = vector.load %arg4[%c0_8, %c0_9] : memref<8x256xf32, #tpu.memory_space<vmem>>, vector<8x256xf32>
    tpu.vector_store %arg4[%c0_8, %c0_9], %17 {strides = array<i32>} : memref<8x256xf32, #tpu.memory_space<vmem>>, vector<8x256xf32>,
    return
  }
  func.func @transform_0(%arg0: i32) -> (i32, i32) {
    %c0_i32 = arith.constant 0 : i32
    %c0_i32_0 = arith.constant 0 : i32
    return %arg0, %c0_i32 : i32, i32
  }
  func.func @transform_1(%arg0: i32) -> (i32, i32) {
    %c0_i32 = arith.constant 0 : i32
    %c0_i32_0 = arith.constant 0 : i32
    %c0_i32_1 = arith.constant 0 : i32
    return %c0_i32, %c0_i32_0 : i32, i32
  }
  func.func @transform_2(%arg0: i32) -> (i32, i32) {
    %c0_i32 = arith.constant 0 : i32
    %c0_i32_0 = arith.constant 0 : i32
    %c0_i32_1 = arith.constant 0 : i32
    return %c0_i32, %c0_i32_0 : i32, i32
  }
  func.func @transform_3(%arg0: i32) -> (i32, i32) {
    %c0_i32 = arith.constant 0 : i32
    %c0_i32_0 = arith.constant 0 : i32
    return %arg0, %c0_i32 : i32, i32
  }
}

module attributes {stable_mosaic.version = 11 : i64} {
  func.func @_block_kernel(%arg0: i32, %arg1: memref<8x32xf32, #tpu.memory_space<vmem>>, %arg2: memref<1x32xf32, #tpu.memory_space<vmem>>, %arg3: memref<32x32xf32, #tpu.memory_space<vmem>>, %arg4: memref<32x32xf32, #tpu.memory_space<vmem>>, %arg5: memref<32x32xf32, #tpu.memory_space<vmem>>, %arg6: memref<32x32xf32, #tpu.memory_space<vmem>>, %arg7: memref<1x32xf32, #tpu.memory_space<vmem>>, %arg8: memref<96x32xf32, #tpu.memory_space<vmem>>, %arg9: memref<96x32xf32, #tpu.memory_space<vmem>>, %arg10: memref<32x96xf32, #tpu.memory_space<vmem>>, %arg11: memref<8x32xf32, #tpu.memory_space<vmem>>, %arg12: memref<8x32xf32, #tpu.memory_space<vmem>>, %arg13: memref<32x32xf32, #tpu.memory_space<vmem>>, %arg14: memref<8x32xf32, #tpu.memory_space<vmem>>) attributes {dimension_semantics = [#tpu.dimension_semantics<parallel>], iteration_bounds = array<i64: 2>, scalar_prefetch = 0 : i64, scratch_operands = 0 : i64, tpu.core_type = #tpu.core_type<tc>, window_params = [{transform_indices = @transform_0, window_bounds = array<i64: 8, 32>}, {pipeline_mode = #tpu.pipeline_mode<synchronous>, transform_indices = @transform_1, window_bounds = array<i64: 1, 32>}, {pipeline_mode = #tpu.pipeline_mode<synchronous>, transform_indices = @transform_2, window_bounds = array<i64: 32, 32>}, {pipeline_mode = #tpu.pipeline_mode<synchronous>, transform_indices = @transform_3, window_bounds = array<i64: 32, 32>}, {pipeline_mode = #tpu.pipeline_mode<synchronous>, transform_indices = @transform_4, window_bounds = array<i64: 32, 32>}, {pipeline_mode = #tpu.pipeline_mode<synchronous>, transform_indices = @transform_5, window_bounds = array<i64: 32, 32>}, {pipeline_mode = #tpu.pipeline_mode<synchronous>, transform_indices = @transform_6, window_bounds = array<i64: 1, 32>}, {pipeline_mode = #tpu.pipeline_mode<synchronous>, transform_indices = @transform_7, window_bounds = array<i64: 96, 32>}, {pipeline_mode = #tpu.pipeline_mode<synchronous>, transform_indices = @transform_8, window_bounds = array<i64: 96, 32>}, {pipeline_mode = #tpu.pipeline_mode<synchronous>, transform_indices = @transform_9, window_bounds = array<i64: 32, 96>}, {pipeline_mode = #tpu.pipeline_mode<synchronous>, transform_indices = @transform_10, window_bounds = array<i64: 8, 32>}, {pipeline_mode = #tpu.pipeline_mode<synchronous>, transform_indices = @transform_11, window_bounds = array<i64: 8, 32>}, {pipeline_mode = #tpu.pipeline_mode<synchronous>, transform_indices = @transform_12, window_bounds = array<i64: 32, 32>}, {transform_indices = @transform_13, window_bounds = array<i64: 8, 32>}]} {
    %c0 = arith.constant 0 : index
    %c0_0 = arith.constant 0 : index
    %0 = vector.load %arg1[%c0, %c0_0] : memref<8x32xf32, #tpu.memory_space<vmem>>, vector<8x32xf32>
    %c0_1 = arith.constant 0 : index
    %c0_2 = arith.constant 0 : index
    %1 = vector.load %arg2[%c0_1, %c0_2] : memref<1x32xf32, #tpu.memory_space<vmem>>, vector<1x32xf32>
    %2 = arith.mulf %0, %0 : vector<8x32xf32>
    %cst = arith.constant dense<0.000000e+00> : vector<8xf32>
    %3 = vector.multi_reduction <add>, %2, %cst [1] : vector<8x32xf32> to vector<8xf32>
    %4 = vector.shape_cast %3 : vector<8xf32> to vector<8x1xf32>
    %cst_3 = arith.constant 3.200000e+01 : f32
    %5 = vector.broadcast %cst_3 : f32 to vector<8x1xf32>
    %6 = arith.divf %4, %5 : vector<8x1xf32>
    %cst_4 = arith.constant 9.99999974E-6 : f32
    %7 = vector.broadcast %cst_4 : f32 to vector<8x1xf32>
    %8 = arith.addf %6, %7 : vector<8x1xf32>
    %9 = math.rsqrt %8 : vector<8x1xf32>
    %10 = vector.broadcast %9 : vector<8x1xf32> to vector<8x32xf32>
    %11 = arith.mulf %0, %10 : vector<8x32xf32>
    %12 = vector.broadcast %1 : vector<1x32xf32> to vector<8x32xf32>
    %13 = arith.mulf %11, %12 : vector<8x32xf32>
    %14 = arith.truncf %13 : vector<8x32xf32> to vector<8x32xbf16>
    %c0_5 = arith.constant 0 : index
    %c0_6 = arith.constant 0 : index
    %15 = vector.load %arg3[%c0_5, %c0_6] : memref<32x32xf32, #tpu.memory_space<vmem>>, vector<32x32xf32>
    %16 = arith.truncf %15 : vector<32x32xf32> to vector<32x32xbf16>
    %cst_7 = arith.constant dense<0.000000e+00> : vector<8x32xf32>
    %17 = tpu.matmul %14, %16, %cst_7 {dimension_numbers = #tpu.dot_dimension_numbers<[1], [1], [0], [0], [0, 0, 1, 0], [], []>} : vector<8x32xbf16>, vector<32x32xbf16>, vector<8x32xf32> -> vector<8x32xf32>
    %c0_8 = arith.constant 0 : index
    %c0_9 = arith.constant 0 : index
    %18 = vector.load %arg4[%c0_8, %c0_9] : memref<32x32xf32, #tpu.memory_space<vmem>>, vector<32x32xf32>
    %19 = arith.truncf %18 : vector<32x32xf32> to vector<32x32xbf16>
    %cst_10 = arith.constant dense<0.000000e+00> : vector<8x32xf32>
    %20 = tpu.matmul %14, %19, %cst_10 {dimension_numbers = #tpu.dot_dimension_numbers<[1], [1], [0], [0], [0, 0, 1, 0], [], []>} : vector<8x32xbf16>, vector<32x32xbf16>, vector<8x32xf32> -> vector<8x32xf32>
    %c0_11 = arith.constant 0 : index
    %c0_12 = arith.constant 0 : index
    %21 = vector.load %arg5[%c0_11, %c0_12] : memref<32x32xf32, #tpu.memory_space<vmem>>, vector<32x32xf32>
    %22 = arith.truncf %21 : vector<32x32xf32> to vector<32x32xbf16>
    %cst_13 = arith.constant dense<0.000000e+00> : vector<8x32xf32>
    %23 = tpu.matmul %14, %22, %cst_13 {dimension_numbers = #tpu.dot_dimension_numbers<[1], [1], [0], [0], [0, 0, 1, 0], [], []>} : vector<8x32xbf16>, vector<32x32xbf16>, vector<8x32xf32> -> vector<8x32xf32>
    %c0_14 = arith.constant 0 : index
    %c0_15 = arith.constant 0 : index
    %24 = vector.load %arg11[%c0_14, %c0_15] : memref<8x32xf32, #tpu.memory_space<vmem>>, vector<8x32xf32>
    %c0_16 = arith.constant 0 : index
    %c0_17 = arith.constant 0 : index
    %25 = vector.load %arg12[%c0_16, %c0_17] : memref<8x32xf32, #tpu.memory_space<vmem>>, vector<8x32xf32>
    %c0_18 = arith.constant 0 : index
    %c0_19 = arith.constant 0 : index
    %26 = vector.load %arg13[%c0_18, %c0_19] : memref<32x32xf32, #tpu.memory_space<vmem>>, vector<32x32xf32>
    %cst_20 = arith.constant dense<0.000000e+00> : vector<8x32xf32>
    %27 = tpu.matmul %17, %26, %cst_20 {dimension_numbers = #tpu.dot_dimension_numbers<[1], [0], [0], [1], [0, 0, 1, 1], [], []>} : vector<8x32xf32>, vector<32x32xf32>, vector<8x32xf32> -> vector<8x32xf32>
    %28 = arith.mulf %17, %24 : vector<8x32xf32>
    %29 = arith.mulf %27, %25 : vector<8x32xf32>
    %30 = arith.addf %28, %29 : vector<8x32xf32>
    %cst_21 = arith.constant dense<0.000000e+00> : vector<8x32xf32>
    %31 = tpu.matmul %20, %26, %cst_21 {dimension_numbers = #tpu.dot_dimension_numbers<[1], [0], [0], [1], [0, 0, 1, 1], [], []>} : vector<8x32xf32>, vector<32x32xf32>, vector<8x32xf32> -> vector<8x32xf32>
    %32 = arith.mulf %20, %24 : vector<8x32xf32>
    %33 = arith.mulf %31, %25 : vector<8x32xf32>
    %34 = arith.addf %32, %33 : vector<8x32xf32>
    %35 = tpu.iota {dimensions = array<i32: 0>} : vector<8x8xi32>
    %36 = tpu.iota {dimensions = array<i32: 1>} : vector<8x8xi32>
    %37 = arith.cmpi sle, %36, %35 : vector<8x8xi32>
    %38 = vector.extract_strided_slice %30 {offsets = [0, 0], sizes = [8, 8], strides = [1, 1]} : vector<8x32xf32> to vector<8x8xf32>
    %39 = vector.extract_strided_slice %34 {offsets = [0, 0], sizes = [8, 8], strides = [1, 1]} : vector<8x32xf32> to vector<8x8xf32>
    %40 = vector.extract_strided_slice %23 {offsets = [0, 0], sizes = [8, 8], strides = [1, 1]} : vector<8x32xf32> to vector<8x8xf32>
    %cst_22 = arith.constant dense<0.000000e+00> : vector<8x8xf32>
    %41 = tpu.matmul %38, %39, %cst_22 {dimension_numbers = #tpu.dot_dimension_numbers<[1], [1], [0], [0], [0, 0, 1, 0], [], []>} : vector<8x8xf32>, vector<8x8xf32>, vector<8x8xf32> -> vector<8x8xf32>
    %cst_23 = arith.constant 0.353553385 : f32
    %42 = vector.broadcast %cst_23 : f32 to vector<8x8xf32>
    %43 = arith.mulf %41, %42 : vector<8x8xf32>
    %cst_24 = arith.constant 0xFF800000 : f32
    %44 = vector.broadcast %cst_24 : f32 to vector<8x8xf32>
    %45 = arith.select %37, %43, %44 : vector<8x8xi1>, vector<8x8xf32>
    %cst_25 = arith.constant dense<0xFF800000> : vector<8xf32>
    %46 = vector.multi_reduction <maximumf>, %45, %cst_25 [1] : vector<8x8xf32> to vector<8xf32>
    %47 = vector.shape_cast %46 : vector<8xf32> to vector<8x1xf32>
    %48 = vector.broadcast %47 : vector<8x1xf32> to vector<8x8xf32>
    %49 = arith.subf %45, %48 : vector<8x8xf32>
    %50 = math.exp %49 : vector<8x8xf32>
    %cst_26 = arith.constant dense<0.000000e+00> : vector<8xf32>
    %51 = vector.multi_reduction <add>, %50, %cst_26 [1] : vector<8x8xf32> to vector<8xf32>
    %52 = vector.shape_cast %51 : vector<8xf32> to vector<8x1xf32>
    %53 = tpu.reciprocal %52 {approx = true} : vector<8x1xf32> -> vector<8x1xf32>
    %54 = vector.broadcast %53 : vector<8x1xf32> to vector<8x8xf32>
    %55 = arith.mulf %50, %54 : vector<8x8xf32>
    %cst_27 = arith.constant dense<0.000000e+00> : vector<8x8xf32>
    %56 = tpu.matmul %55, %40, %cst_27 {dimension_numbers = #tpu.dot_dimension_numbers<[1], [0], [0], [1], [0, 0, 1, 1], [], []>} : vector<8x8xf32>, vector<8x8xf32>, vector<8x8xf32> -> vector<8x8xf32>
    %57 = vector.extract_strided_slice %30 {offsets = [0, 8], sizes = [8, 8], strides = [1, 1]} : vector<8x32xf32> to vector<8x8xf32>
    %58 = vector.extract_strided_slice %34 {offsets = [0, 8], sizes = [8, 8], strides = [1, 1]} : vector<8x32xf32> to vector<8x8xf32>
    %59 = vector.extract_strided_slice %23 {offsets = [0, 8], sizes = [8, 8], strides = [1, 1]} : vector<8x32xf32> to vector<8x8xf32>
    %cst_28 = arith.constant dense<0.000000e+00> : vector<8x8xf32>
    %60 = tpu.matmul %57, %58, %cst_28 {dimension_numbers = #tpu.dot_dimension_numbers<[1], [1], [0], [0], [0, 0, 1, 0], [], []>} : vector<8x8xf32>, vector<8x8xf32>, vector<8x8xf32> -> vector<8x8xf32>
    %cst_29 = arith.constant 0.353553385 : f32
    %61 = vector.broadcast %cst_29 : f32 to vector<8x8xf32>
    %62 = arith.mulf %60, %61 : vector<8x8xf32>
    %cst_30 = arith.constant 0xFF800000 : f32
    %63 = vector.broadcast %cst_30 : f32 to vector<8x8xf32>
    %64 = arith.select %37, %62, %63 : vector<8x8xi1>, vector<8x8xf32>
    %cst_31 = arith.constant dense<0xFF800000> : vector<8xf32>
    %65 = vector.multi_reduction <maximumf>, %64, %cst_31 [1] : vector<8x8xf32> to vector<8xf32>
    %66 = vector.shape_cast %65 : vector<8xf32> to vector<8x1xf32>
    %67 = vector.broadcast %66 : vector<8x1xf32> to vector<8x8xf32>
    %68 = arith.subf %64, %67 : vector<8x8xf32>
    %69 = math.exp %68 : vector<8x8xf32>
    %cst_32 = arith.constant dense<0.000000e+00> : vector<8xf32>
    %70 = vector.multi_reduction <add>, %69, %cst_32 [1] : vector<8x8xf32> to vector<8xf32>
    %71 = vector.shape_cast %70 : vector<8xf32> to vector<8x1xf32>
    %72 = tpu.reciprocal %71 {approx = true} : vector<8x1xf32> -> vector<8x1xf32>
    %73 = vector.broadcast %72 : vector<8x1xf32> to vector<8x8xf32>
    %74 = arith.mulf %69, %73 : vector<8x8xf32>
    %cst_33 = arith.constant dense<0.000000e+00> : vector<8x8xf32>
    %75 = tpu.matmul %74, %59, %cst_33 {dimension_numbers = #tpu.dot_dimension_numbers<[1], [0], [0], [1], [0, 0, 1, 1], [], []>} : vector<8x8xf32>, vector<8x8xf32>, vector<8x8xf32> -> vector<8x8xf32>
    %76 = vector.extract_strided_slice %30 {offsets = [0, 16], sizes = [8, 8], strides = [1, 1]} : vector<8x32xf32> to vector<8x8xf32>
    %77 = vector.extract_strided_slice %34 {offsets = [0, 16], sizes = [8, 8], strides = [1, 1]} : vector<8x32xf32> to vector<8x8xf32>
    %78 = vector.extract_strided_slice %23 {offsets = [0, 16], sizes = [8, 8], strides = [1, 1]} : vector<8x32xf32> to vector<8x8xf32>
    %cst_34 = arith.constant dense<0.000000e+00> : vector<8x8xf32>
    %79 = tpu.matmul %76, %77, %cst_34 {dimension_numbers = #tpu.dot_dimension_numbers<[1], [1], [0], [0], [0, 0, 1, 0], [], []>} : vector<8x8xf32>, vector<8x8xf32>, vector<8x8xf32> -> vector<8x8xf32>
    %cst_35 = arith.constant 0.353553385 : f32
    %80 = vector.broadcast %cst_35 : f32 to vector<8x8xf32>
    %81 = arith.mulf %79, %80 : vector<8x8xf32>
    %cst_36 = arith.constant 0xFF800000 : f32
    %82 = vector.broadcast %cst_36 : f32 to vector<8x8xf32>
    %83 = arith.select %37, %81, %82 : vector<8x8xi1>, vector<8x8xf32>
    %cst_37 = arith.constant dense<0xFF800000> : vector<8xf32>
    %84 = vector.multi_reduction <maximumf>, %83, %cst_37 [1] : vector<8x8xf32> to vector<8xf32>
    %85 = vector.shape_cast %84 : vector<8xf32> to vector<8x1xf32>
    %86 = vector.broadcast %85 : vector<8x1xf32> to vector<8x8xf32>
    %87 = arith.subf %83, %86 : vector<8x8xf32>
    %88 = math.exp %87 : vector<8x8xf32>
    %cst_38 = arith.constant dense<0.000000e+00> : vector<8xf32>
    %89 = vector.multi_reduction <add>, %88, %cst_38 [1] : vector<8x8xf32> to vector<8xf32>
    %90 = vector.shape_cast %89 : vector<8xf32> to vector<8x1xf32>
    %91 = tpu.reciprocal %90 {approx = true} : vector<8x1xf32> -> vector<8x1xf32>
    %92 = vector.broadcast %91 : vector<8x1xf32> to vector<8x8xf32>
    %93 = arith.mulf %88, %92 : vector<8x8xf32>
    %cst_39 = arith.constant dense<0.000000e+00> : vector<8x8xf32>
    %94 = tpu.matmul %93, %78, %cst_39 {dimension_numbers = #tpu.dot_dimension_numbers<[1], [0], [0], [1], [0, 0, 1, 1], [], []>} : vector<8x8xf32>, vector<8x8xf32>, vector<8x8xf32> -> vector<8x8xf32>
    %95 = vector.extract_strided_slice %30 {offsets = [0, 24], sizes = [8, 8], strides = [1, 1]} : vector<8x32xf32> to vector<8x8xf32>
    %96 = vector.extract_strided_slice %34 {offsets = [0, 24], sizes = [8, 8], strides = [1, 1]} : vector<8x32xf32> to vector<8x8xf32>
    %97 = vector.extract_strided_slice %23 {offsets = [0, 24], sizes = [8, 8], strides = [1, 1]} : vector<8x32xf32> to vector<8x8xf32>
    %cst_40 = arith.constant dense<0.000000e+00> : vector<8x8xf32>
    %98 = tpu.matmul %95, %96, %cst_40 {dimension_numbers = #tpu.dot_dimension_numbers<[1], [1], [0], [0], [0, 0, 1, 0], [], []>} : vector<8x8xf32>, vector<8x8xf32>, vector<8x8xf32> -> vector<8x8xf32>
    %cst_41 = arith.constant 0.353553385 : f32
    %99 = vector.broadcast %cst_41 : f32 to vector<8x8xf32>
    %100 = arith.mulf %98, %99 : vector<8x8xf32>
    %cst_42 = arith.constant 0xFF800000 : f32
    %101 = vector.broadcast %cst_42 : f32 to vector<8x8xf32>
    %102 = arith.select %37, %100, %101 : vector<8x8xi1>, vector<8x8xf32>
    %cst_43 = arith.constant dense<0xFF800000> : vector<8xf32>
    %103 = vector.multi_reduction <maximumf>, %102, %cst_43 [1] : vector<8x8xf32> to vector<8xf32>
    %104 = vector.shape_cast %103 : vector<8xf32> to vector<8x1xf32>
    %105 = vector.broadcast %104 : vector<8x1xf32> to vector<8x8xf32>
    %106 = arith.subf %102, %105 : vector<8x8xf32>
    %107 = math.exp %106 : vector<8x8xf32>
    %cst_44 = arith.constant dense<0.000000e+00> : vector<8xf32>
    %108 = vector.multi_reduction <add>, %107, %cst_44 [1] : vector<8x8xf32> to vector<8xf32>
    %109 = vector.shape_cast %108 : vector<8xf32> to vector<8x1xf32>
    %110 = tpu.reciprocal %109 {approx = true} : vector<8x1xf32> -> vector<8x1xf32>
    %111 = vector.broadcast %110 : vector<8x1xf32> to vector<8x8xf32>
    %112 = arith.mulf %107, %111 : vector<8x8xf32>
    %cst_45 = arith.constant dense<0.000000e+00> : vector<8x8xf32>
    %113 = tpu.matmul %112, %97, %cst_45 {dimension_numbers = #tpu.dot_dimension_numbers<[1], [0], [0], [1], [0, 0, 1, 1], [], []>} : vector<8x8xf32>, vector<8x8xf32>, vector<8x8xf32> -> vector<8x8xf32>
    %114 = tpu.concatenate %56, %75, %94, %113 in 1 : vector<8x8xf32>, vector<8x8xf32>, vector<8x8xf32>, vector<8x8xf32> -> vector<8x32xf32>
    %115 = arith.truncf %114 : vector<8x32xf32> to vector<8x32xbf16>
    %c0_46 = arith.constant 0 : index
    %c0_47 = arith.constant 0 : index
    %116 = vector.load %arg6[%c0_46, %c0_47] : memref<32x32xf32, #tpu.memory_space<vmem>>, vector<32x32xf32>
    %117 = arith.truncf %116 : vector<32x32xf32> to vector<32x32xbf16>
    %cst_48 = arith.constant dense<0.000000e+00> : vector<8x32xf32>
    %118 = tpu.matmul %115, %117, %cst_48 {dimension_numbers = #tpu.dot_dimension_numbers<[1], [1], [0], [0], [0, 0, 1, 0], [], []>} : vector<8x32xbf16>, vector<32x32xbf16>, vector<8x32xf32> -> vector<8x32xf32>
    %119 = arith.addf %0, %118 : vector<8x32xf32>
    %c0_49 = arith.constant 0 : index
    %c0_50 = arith.constant 0 : index
    %120 = vector.load %arg7[%c0_49, %c0_50] : memref<1x32xf32, #tpu.memory_space<vmem>>, vector<1x32xf32>
    %121 = arith.mulf %119, %119 : vector<8x32xf32>
    %cst_51 = arith.constant dense<0.000000e+00> : vector<8xf32>
    %122 = vector.multi_reduction <add>, %121, %cst_51 [1] : vector<8x32xf32> to vector<8xf32>
    %123 = vector.shape_cast %122 : vector<8xf32> to vector<8x1xf32>
    %cst_52 = arith.constant 3.200000e+01 : f32
    %124 = vector.broadcast %cst_52 : f32 to vector<8x1xf32>
    %125 = arith.divf %123, %124 : vector<8x1xf32>
    %cst_53 = arith.constant 9.99999974E-6 : f32
    %126 = vector.broadcast %cst_53 : f32 to vector<8x1xf32>
    %127 = arith.addf %125, %126 : vector<8x1xf32>
    %128 = math.rsqrt %127 : vector<8x1xf32>
    %129 = vector.broadcast %128 : vector<8x1xf32> to vector<8x32xf32>
    %130 = arith.mulf %119, %129 : vector<8x32xf32>
    %131 = vector.broadcast %120 : vector<1x32xf32> to vector<8x32xf32>
    %132 = arith.mulf %130, %131 : vector<8x32xf32>
    %133 = arith.truncf %132 : vector<8x32xf32> to vector<8x32xbf16>
    %c0_54 = arith.constant 0 : index
    %c0_55 = arith.constant 0 : index
    %134 = vector.load %arg8[%c0_54, %c0_55] : memref<96x32xf32, #tpu.memory_space<vmem>>, vector<96x32xf32>
    %135 = arith.truncf %134 : vector<96x32xf32> to vector<96x32xbf16>
    %cst_56 = arith.constant dense<0.000000e+00> : vector<8x96xf32>
    %136 = tpu.matmul %133, %135, %cst_56 {dimension_numbers = #tpu.dot_dimension_numbers<[1], [1], [0], [0], [0, 0, 1, 0], [], []>} : vector<8x32xbf16>, vector<96x32xbf16>, vector<8x96xf32> -> vector<8x96xf32>
    %c0_57 = arith.constant 0 : index
    %c0_58 = arith.constant 0 : index
    %137 = vector.load %arg9[%c0_57, %c0_58] : memref<96x32xf32, #tpu.memory_space<vmem>>, vector<96x32xf32>
    %138 = arith.truncf %137 : vector<96x32xf32> to vector<96x32xbf16>
    %cst_59 = arith.constant dense<0.000000e+00> : vector<8x96xf32>
    %139 = tpu.matmul %133, %138, %cst_59 {dimension_numbers = #tpu.dot_dimension_numbers<[1], [1], [0], [0], [0, 0, 1, 0], [], []>} : vector<8x32xbf16>, vector<96x32xbf16>, vector<8x96xf32> -> vector<8x96xf32>
    %cst_60 = arith.constant 0.000000e+00 : f32
    %140 = vector.broadcast %cst_60 : f32 to vector<8x96xf32>
    %141 = arith.subf %140, %136 : vector<8x96xf32>
    %142 = math.exp %141 : vector<8x96xf32>
    %cst_61 = arith.constant 1.000000e+00 : f32
    %143 = vector.broadcast %cst_61 : f32 to vector<8x96xf32>
    %144 = arith.addf %143, %142 : vector<8x96xf32>
    %145 = tpu.reciprocal %144 {approx = true} : vector<8x96xf32> -> vector<8x96xf32>
    %146 = arith.mulf %136, %145 : vector<8x96xf32>
    %147 = arith.mulf %146, %139 : vector<8x96xf32>
    %148 = arith.truncf %147 : vector<8x96xf32> to vector<8x96xbf16>
    %c0_62 = arith.constant 0 : index
    %c0_63 = arith.constant 0 : index
    %149 = vector.load %arg10[%c0_62, %c0_63] : memref<32x96xf32, #tpu.memory_space<vmem>>, vector<32x96xf32>
    %150 = arith.truncf %149 : vector<32x96xf32> to vector<32x96xbf16>
    %cst_64 = arith.constant dense<0.000000e+00> : vector<8x32xf32>
    %151 = tpu.matmul %148, %150, %cst_64 {dimension_numbers = #tpu.dot_dimension_numbers<[1], [1], [0], [0], [0, 0, 1, 0], [], []>} : vector<8x96xbf16>, vector<32x96xbf16>, vector<8x32xf32> -> vector<8x32xf32>
    %152 = arith.addf %119, %151 : vector<8x32xf32>
    %c0_65 = arith.constant 0 : index
    %c0_66 = arith.constant 0 : index
    %153 = vector.load %arg14[%c0_65, %c0_66] : memref<8x32xf32, #tpu.memory_space<vmem>>, vector<8x32xf32>
    tpu.vector_store %arg14[%c0_65, %c0_66], %152 {strides = array<i32>} : memref<8x32xf32, #tpu.memory_space<vmem>>, vector<8x32xf32>,
    return
  }
  func.func @transform_0(%arg0: i32) -> (i32, i32) {
    %c0_i32 = arith.constant 0 : i32
    %c0_i32_0 = arith.constant 0 : i32
    return %arg0, %c0_i32 : i32, i32
  }
  func.func @transform_1(%arg0: i32) -> (i32, i32) {
    %c0_i32 = arith.constant 0 : i32
    %c0_i32_0 = arith.constant 0 : i32
    %c0_i32_1 = arith.constant 0 : i32
    return %c0_i32, %c0_i32_0 : i32, i32
  }
  func.func @transform_2(%arg0: i32) -> (i32, i32) {
    %c0_i32 = arith.constant 0 : i32
    %c0_i32_0 = arith.constant 0 : i32
    %c0_i32_1 = arith.constant 0 : i32
    return %c0_i32, %c0_i32_0 : i32, i32
  }
  func.func @transform_3(%arg0: i32) -> (i32, i32) {
    %c0_i32 = arith.constant 0 : i32
    %c0_i32_0 = arith.constant 0 : i32
    %c0_i32_1 = arith.constant 0 : i32
    return %c0_i32, %c0_i32_0 : i32, i32
  }
  func.func @transform_4(%arg0: i32) -> (i32, i32) {
    %c0_i32 = arith.constant 0 : i32
    %c0_i32_0 = arith.constant 0 : i32
    %c0_i32_1 = arith.constant 0 : i32
    return %c0_i32, %c0_i32_0 : i32, i32
  }
  func.func @transform_5(%arg0: i32) -> (i32, i32) {
    %c0_i32 = arith.constant 0 : i32
    %c0_i32_0 = arith.constant 0 : i32
    %c0_i32_1 = arith.constant 0 : i32
    return %c0_i32, %c0_i32_0 : i32, i32
  }
  func.func @transform_6(%arg0: i32) -> (i32, i32) {
    %c0_i32 = arith.constant 0 : i32
    %c0_i32_0 = arith.constant 0 : i32
    %c0_i32_1 = arith.constant 0 : i32
    return %c0_i32, %c0_i32_0 : i32, i32
  }
  func.func @transform_7(%arg0: i32) -> (i32, i32) {
    %c0_i32 = arith.constant 0 : i32
    %c0_i32_0 = arith.constant 0 : i32
    %c0_i32_1 = arith.constant 0 : i32
    return %c0_i32, %c0_i32_0 : i32, i32
  }
  func.func @transform_8(%arg0: i32) -> (i32, i32) {
    %c0_i32 = arith.constant 0 : i32
    %c0_i32_0 = arith.constant 0 : i32
    %c0_i32_1 = arith.constant 0 : i32
    return %c0_i32, %c0_i32_0 : i32, i32
  }
  func.func @transform_9(%arg0: i32) -> (i32, i32) {
    %c0_i32 = arith.constant 0 : i32
    %c0_i32_0 = arith.constant 0 : i32
    %c0_i32_1 = arith.constant 0 : i32
    return %c0_i32, %c0_i32_0 : i32, i32
  }
  func.func @transform_10(%arg0: i32) -> (i32, i32) {
    %c0_i32 = arith.constant 0 : i32
    %c0_i32_0 = arith.constant 0 : i32
    %c0_i32_1 = arith.constant 0 : i32
    return %c0_i32, %c0_i32_0 : i32, i32
  }
  func.func @transform_11(%arg0: i32) -> (i32, i32) {
    %c0_i32 = arith.constant 0 : i32
    %c0_i32_0 = arith.constant 0 : i32
    %c0_i32_1 = arith.constant 0 : i32
    return %c0_i32, %c0_i32_0 : i32, i32
  }
  func.func @transform_12(%arg0: i32) -> (i32, i32) {
    %c0_i32 = arith.constant 0 : i32
    %c0_i32_0 = arith.constant 0 : i32
    %c0_i32_1 = arith.constant 0 : i32
    return %c0_i32, %c0_i32_0 : i32, i32
  }
  func.func @transform_13(%arg0: i32) -> (i32, i32) {
    %c0_i32 = arith.constant 0 : i32
    %c0_i32_0 = arith.constant 0 : i32
    return %arg0, %c0_i32 : i32, i32
  }
}

module attributes {stable_mosaic.version = 11 : i64} {
  func.func @_ce_kernel(%arg0: memref<16x256xf32, #tpu.memory_space<vmem>>, %arg1: memref<16x1xi32, #tpu.memory_space<vmem>>, %arg2: memref<1x1xf32, #tpu.memory_space<smem>>) attributes {dimension_semantics = [], scalar_prefetch = 0 : i64, scratch_operands = 0 : i64, tpu.core_type = #tpu.core_type<tc>} {
    %c0 = arith.constant 0 : index
    %c0_0 = arith.constant 0 : index
    %0 = vector.load %arg0[%c0, %c0_0] : memref<16x256xf32, #tpu.memory_space<vmem>>, vector<16x256xf32>
    %c0_1 = arith.constant 0 : index
    %c0_2 = arith.constant 0 : index
    %1 = vector.load %arg1[%c0_1, %c0_2] : memref<16x1xi32, #tpu.memory_space<vmem>>, vector<16x1xi32>
    %cst = arith.constant dense<0xFF800000> : vector<16xf32>
    %2 = vector.multi_reduction <maximumf>, %0, %cst [1] : vector<16x256xf32> to vector<16xf32>
    %3 = vector.shape_cast %2 : vector<16xf32> to vector<16x1xf32>
    %4 = vector.broadcast %3 : vector<16x1xf32> to vector<16x256xf32>
    %5 = arith.subf %0, %4 : vector<16x256xf32>
    %6 = math.exp %5 : vector<16x256xf32>
    %cst_3 = arith.constant dense<0.000000e+00> : vector<16xf32>
    %7 = vector.multi_reduction <add>, %6, %cst_3 [1] : vector<16x256xf32> to vector<16xf32>
    %8 = vector.shape_cast %7 : vector<16xf32> to vector<16x1xf32>
    %9 = math.log %8 : vector<16x1xf32>
    %10 = arith.addf %3, %9 : vector<16x1xf32>
    %11 = tpu.iota {dimensions = array<i32: 1>} : vector<16x256xi32>
    %12 = vector.broadcast %1 : vector<16x1xi32> to vector<16x256xi32>
    %13 = arith.cmpi eq, %11, %12 : vector<16x256xi32>
    %cst_4 = arith.constant 0.000000e+00 : f32
    %14 = vector.broadcast %cst_4 : f32 to vector<16x256xf32>
    %15 = arith.select %13, %0, %14 : vector<16x256xi1>, vector<16x256xf32>
    %cst_5 = arith.constant dense<0.000000e+00> : vector<16xf32>
    %16 = vector.multi_reduction <add>, %15, %cst_5 [1] : vector<16x256xf32> to vector<16xf32>
    %17 = vector.shape_cast %16 : vector<16xf32> to vector<16x1xf32>
    %18 = arith.subf %10, %17 : vector<16x1xf32>
    %19 = vector.shape_cast %18 : vector<16x1xf32> to vector<1x16x1xf32>
    %cst_6 = arith.constant dense<0.000000e+00> : vector<1xf32>
    %20 = vector.multi_reduction <add>, %19, %cst_6 [1, 2] : vector<1x16x1xf32> to vector<1xf32>
    %21 = vector.shape_cast %20 : vector<1xf32> to vector<1x1x1xf32>
    %22 = vector.extract %21[0, 0, 0] : f32 from vector<1x1x1xf32>
    %cst_7 = arith.constant 6.250000e-02 : f32
    %23 = arith.mulf %22, %cst_7 : f32
    %c0_8 = arith.constant 0 : index
    %c0_9 = arith.constant 0 : index
    %24 = memref.load %arg2[%c0_8, %c0_9] : memref<1x1xf32, #tpu.memory_space<smem>>
    memref.store %23, %arg2[%c0_8, %c0_9] : memref<1x1xf32, #tpu.memory_space<smem>>
    return
  }
}

</mosaic_0001>

<llo_original>
// kernel: tile.11
$region0: #{tile.11}
  %s0 = inlined_call_operand.vmem [shape: f32[8,4,8], index: 0, kind: input, shape index: {}]
  %s1 = inlined_call_operand.vmem [shape: f32[8,32], index: 1, kind: output, shape index: {}]
  $region1: #{tile.11} parent=0
    #allocation0 [shape = 'u8[32768]{0}', space=vmem, size = 0x8000, scoped, tag = 'scoped mem for input reshape']
    %s3 = ssub.s32 16, 1
    %s4 = scalar_lea.vmem %s0, 28
    %v5 = vld [vmem:[%s4] sm:%s3]
    %s6 = scalar_lea.vmem [#allocation0], 56
    %7 = vst [vmem:[%s6] sm:%s3] %v5
    %s8 = scalar_lea.vmem %s0, 24
    %v9 = vld [vmem:[%s8] sm:%s3]
    %s10 = scalar_lea.vmem [#allocation0], 48
    %11 = vst [vmem:[%s10] sm:%s3] %v9
    %s12 = scalar_lea.vmem %s0, 20
    %v13 = vld [vmem:[%s12] sm:%s3]
    %s14 = scalar_lea.vmem [#allocation0], 40
    %15 = vst [vmem:[%s14] sm:%s3] %v13
    %s16 = scalar_lea.vmem %s0, 16
    %v17 = vld [vmem:[%s16] sm:%s3]
    %s18 = scalar_lea.vmem [#allocation0], 32
    %19 = vst [vmem:[%s18] sm:%s3] %v17
    %s20 = scalar_lea.vmem %s0, 12
    %v21 = vld [vmem:[%s20] sm:%s3]
    %s22 = scalar_lea.vmem [#allocation0], 24
    %23 = vst [vmem:[%s22] sm:%s3] %v21
    %s24 = scalar_lea.vmem %s0, 8
    %v25 = vld [vmem:[%s24] sm:%s3]
    %s26 = scalar_lea.vmem [#allocation0], 16
    %27 = vst [vmem:[%s26] sm:%s3] %v25
    %s28 = scalar_lea.vmem %s0, 4
    %v29 = vld [vmem:[%s28] sm:%s3]
    %s30 = scalar_lea.vmem [#allocation0], 8
    %31 = vst [vmem:[%s30] sm:%s3] %v29
    %v32 = vld [vmem:[%s0] sm:%s3]
    %33 = vst [vmem:[#allocation0] sm:%s3] %v32
    %v34 = vld [vmem:[#allocation0] ss:$8 sm:$0xf]
    %v35 = vld [vmem:[#allocation0] ss:$8 sm:$0xf0]
    %vm36 = vcmask 1047556
    %v37 = vsel %vm36, %v35, %v34
    %vm38 = vcmask 64512
    %39 = vst.msk [vmem:[%s1] sm:$0xff] %vm38, %v37
    %s40 = scalar_lea.vmem [#allocation0], 3
    %v41 = vld [vmem:[%s40] ss:$8 sm:$0xf]
    %s42 = scalar_lea.vmem [#allocation0], 3
    %v43 = vld [vmem:[%s42] ss:$8 sm:$0xf0]
    %vm44 = vcmask 1047556
    %v45 = vsel %vm44, %v43, %v41
    %46 = vrot.lane.b32.xlu0 %v45, 24
    %v47 = vpop.permute.xlu0 %46
    %vm48 = vcmask 261312
    %49 = vst.msk [vmem:[%s1] sm:$0xff] %vm48, %v47
    %s50 = scalar_lea.vmem [#allocation0], 2
    %v51 = vld [vmem:[%s50] ss:$8 sm:$0xf]
    %s52 = scalar_lea.vmem [#allocation0], 2
    %v53 = vld [vmem:[%s52] ss:$8 sm:$0xf0]
    %vm54 = vcmask 1047556
    %v55 = vsel %vm54, %v53, %v51
    %56 = vrot.lane.b32.xlu0 %v55, 16
    %v57 = vpop.permute.xlu0 %56
    %vm58 = vcmask 195712
    %59 = vst.msk [vmem:[%s1] sm:$0xff] %vm58, %v57
    %s60 = scalar_lea.vmem [#allocation0], 1
    %v61 = vld [vmem:[%s60] ss:$8 sm:$0xf]
    %s62 = scalar_lea.vmem [#allocation0], 1
    %v63 = vld [vmem:[%s62] ss:$8 sm:$0xf0]
    %vm64 = vcmask 1047556
    %v65 = vsel %vm64, %v63, %v61
    %66 = vrot.lane.b32.xlu0 %v65, 8
    %v67 = vpop.permute.xlu0 %66
    %vm68 = vcmask 130112
    %69 = vst.msk [vmem:[%s1] sm:$0xff] %vm68, %v67

// kernel: forward.7
$region0: #{forward.7}
  #allocation0 [shape = 'u32[]', space=smem, size = 0x4, offset = 0x4, fixed_abs, tag = 'smem constant byte address 0x4 - core index']
  #allocation1 [shape = 'u32[72,128]{1,0:T(1,128)}', space=vmem, size = 0x9000, scoped, tag = 'internal scratch']
  %s0 = inlined_call_operand.vmem [shape: f32[16,256], index: 0, kind: input, shape index: {}]
  %s1 = inlined_call_operand.vmem [shape: s32[16,1], index: 1, kind: input, shape index: {}]
  %s2 = inlined_call_operand.hbm [shape: f32[1,1], index: 2, kind: output, shape index: {}]
  %s3 = sld [smem:[#allocation0]]
  $region18: #{forward.7} parent=0
    _
  %s5 = ssub.s32 1, %s3
  %s6 = scalar_select 0, %s5, %s3
  $region1: #{forward.7} parent=0
    #allocation2 [shape = 'u8[512]{0}', space=smem, size = 0x200, scoped, tag = 'output window, operand 0, single buffered']
    #allocation3 [shape = 's32[1]{0}', space=sflag, size = 0x4, scoped, tag = 'scoped memory for forward.7']
    %7 = vsyncpa [#allocation3], 0
    // Predicated region
    $region2: #{forward.7} parent=1 // pred_check
      _
    $region3: #{forward.7} parent=1 // pred_check_branch
      %9 = sbr.rel (0) target = $region5
    $region4: #{forward.7} parent=1 // pred_region
      _
    $region5: #{forward.7} parent=1 // pred_fallthru
      _
    // Predicated region
    $region6: #{forward.7} parent=1 // pred_check
      _
    $region7: #{forward.7} parent=1 // pred_check_branch
      %11 = sbr.rel (0) target = $region9
    $region8: #{forward.7} parent=1 // pred_region
      _
    $region9: #{forward.7} parent=1 // pred_fallthru
      _
    %v12 = vld [vmem:[%s0] sm:$0xff]
    %v13 = vld [vmem:[%s0 + $0x8] sm:$0xff]
    %v14 = vld [vmem:[%s0 + $0x10] sm:$0xff]
    %v15 = vld [vmem:[%s0 + $0x18] sm:$0xff]
    %v16 = vld [vmem:[%s1] sm:$0xff]
    %v17 = vld [vmem:[%s1 + $0x8] sm:$0xff]
    %v18 = vmax.f32 %v12, %v13
    %19 = vmax.xlane.f32.xlu0 %v18
    %v20 = vpop.xlane.xlu0 %19
    %v21 = vmax.f32 %v14, %v15
    %22 = vmax.xlane.f32.xlu0 %v21
    %v23 = vpop.xlane.xlu0 %22
    %v24 = vsub.f32 %v12, %v20
    %v25 = vsub.f32 %v13, %v20
    %v26 = vsub.f32 %v14, %v23
    %v27 = vsub.f32 %v15, %v23
    %v28 = vmul.f32 %v24, 1.442695
    %v29 = vpow.pop %v28
    %v30 = vmul.f32 %v25, 1.442695
    %v31 = vpow.pop %v30
    %v32 = vmul.f32 %v26, 1.442695
    %v33 = vpow.pop %v32
    %v34 = vmul.f32 %v27, 1.442695
    %v35 = vpow.pop %v34
    %v36 = vadd.f32 %v29, %v31
    %37 = vadd.xlane.f32.xlu0 %v36
    %v38 = vpop.xlane.xlu0 %37
    %v39 = vadd.f32 %v33, %v35
    %40 = vadd.xlane.f32.xlu0 %v39
    %v41 = vpop.xlane.xlu0 %40
    %v42 = vlog2.pop %v38
    %v43 = vmul.f32 %v42, 0.6931472
    %v44 = vlog2.pop %v41
    %v45 = vmul.f32 %v44, 0.6931472
    %v46 = vadd.f32 %v20, %v43
    %v47 = vadd.f32 %v23, %v45
    %v48 = vlaneseq
    %v49 = vand.u32 %v48, 127
    %v50 = vadd.s32 %v49, 128
    %51 = vset.pattern.permute.xlu0 0
    %52 = vperm.xlu0 %51, %v16
    %v53 = vpop.permute.xlu0 %52
    %54 = vset.pattern.permute.xlu0 0
    %55 = vperm.xlu0 %54, %v17
    %v56 = vpop.permute.xlu0 %55
    %vm57 = vcmp.eq.s32.totalorder %v49, %v53
    %vm58 = vcmp.eq.s32.totalorder %v50, %v53
    %vm59 = vcmp.eq.s32.totalorder %v49, %v56
    %vm60 = vcmp.eq.s32.totalorder %v50, %v56
    %v61 = vsel %vm57, %v12, 0.0
    %v62 = vsel %vm58, %v13, 0.0
    %v63 = vsel %vm59, %v14, 0.0
    %v64 = vsel %vm60, %v15, 0.0
    %v65 = vadd.f32 %v61, %v62
    %66 = vadd.xlane.f32.xlu0 %v65
    %v67 = vpop.xlane.xlu0 %66
    %v68 = vadd.f32 %v63, %v64
    %69 = vadd.xlane.f32.xlu0 %v68
    %v70 = vpop.xlane.xlu0 %69
    %v71 = vsub.f32 %v46, %v67
    %v72 = vsub.f32 %v47, %v70
    %vm73 = vcmask 7168
    %v74 = vsel %vm73, %v71, 0.0
    %v75 = vsel %vm73, %v72, 0.0
    %v76 = vadd.f32 %v74, %v75
    %77 = vadd.xlane.f32.xlu0 %v76
    %v78 = vpop.xlane.xlu0 %77
    %v79 = vrot.slane %v78, 4
    %v80 = vadd.f32 %v78, %v79
    %v81 = vrot.slane %v80, 2
    %v82 = vadd.f32 %v80, %v81
    %v83 = vrot.slane %v82, 1
    %v84 = vadd.f32 %v82, %v83
    %s85 = vtos %v84
    %s86 = smul.f32 %s85, 0.0625
    %s87 = scalar_lea.smem [#allocation2], 0
    %88 = sst [smem:[%s87]] %s86
    // Predicated region
    $region10: #{forward.7} parent=1 // pred_check
      _
    $region11: #{forward.7} parent=1 // pred_check_branch
      %90 = sbr.rel (0) target = $region13
    $region12: #{forward.7} parent=1 // pred_region
      %92 = vsyncadd [#allocation3], 0
      %s94 = sshll.u32 %s2, 4
      %s95 = int_to_ptr.hbm [resolvable:$true] %s94
      %97 = dma.smem_to_hbm [#allocation2], 16, %s95, [#allocation3]
    $region13: #{forward.7} parent=1 // pred_fallthru
      _
    // Predicated region
    $region14: #{forward.7} parent=1 // pred_check
      _
    $region15: #{forward.7} parent=1 // pred_check_branch
      %99 = sbr.rel (0) target = $region17
    $region16: #{forward.7} parent=1 // pred_region
      %101 = dma.done [#allocation3], 16
    $region17: #{forward.7} parent=1 // pred_fallthru
      _
    %102 = sfence
    %103 = vsyncpa [#allocation3], 1

// kernel: forward.6
$region0: #{forward.6}
  #allocation0 [shape = 'u32[]', space=smem, size = 0x4, offset = 0x4, fixed_abs, tag = 'smem constant byte address 0x4 - core index']
  #allocation1 [shape = 'u32[72,128]{1,0:T(1,128)}', space=vmem, size = 0x9000, scoped, tag = 'internal scratch']
  %s0 = inlined_call_operand.vmem [shape: f32[16,32], index: 0, kind: input, shape index: {}]
  %s1 = inlined_call_operand.vmem [shape: f32[1,32], index: 1, kind: input, shape index: {}]
  %s2 = inlined_call_operand.vmem [shape: f32[256,32], index: 2, kind: input, shape index: {}]
  %s3 = inlined_call_operand.vmem [shape: f32[16,256], index: 3, kind: output, shape index: {}]
  %s4 = sld [smem:[#allocation0]]
  $region45: #{forward.6} parent=0
    _
  %s6 = ssub.s32 1, %s4
  %s7 = scalar_select 0, %s6, %s4
  loop: start=0, step=1, limit=4
  $region2: #{forward.6} parent=0 // loop_pre_header
    _
  $region3: #{forward.6} parent=0 // loop_header
    %s9 = sphi 0, %s13
    %p10 = scmp.ge.s32.totalorder %s9, 4
    %s19 = sphi 0, %s21
    %s22 = sphi 0, %s19
    %s23 = sphi 0, %s22
    %s39 = sphi 0, %s23
    %s43 = sphi 0, %s43
    %s45 = sphi 0, %s43
    %s46 = sphi 0, %s45
    %s60 = sphi 0, %s46
    %s64 = sphi 0, %s64
    %s66 = sphi 0, %s64
    %s67 = sphi 0, %s66
    %s81 = sphi 0, %s67
    %s87 = sphi 0, %s89
    %s90 = sphi 0, %s87
    %s91 = sphi 0, %s90
    %s107 = sphi 0, %s91
  $region4: #{forward.6} parent=0 // loop_header_branch
    %12 = sbr.rel (%p10) target = $region8
  $region5: #{forward.6} parent=0 // loop_body
    %s14 = ssub.s32 %s9, 1
    %s15 = ssub.s32 %s9, 2
    %s16 = sadd.s32 %s9, 1
    %s17 = ssub.s32 %s9, %s16
    %p18 = scmp.eq.s32.totalorder %s17, 0
    %s20 = sadd.s32 %s19, 1
    %s21 = scalar_select %p18, %s19, %s20
    %p24 = pneg %p18
    %p25 = scmp.eq.s32.totalorder %s9, 1
    %p26 = por %p24, %p25
    %p27 = scmp.ne.s32.totalorder %s19, %s22
    %p28 = scmp.eq.s32.totalorder %s9, 0
    %p29 = por %p27, %p28
    %p30 = scmp.ne.s32.totalorder %s19, %s22
    %p31 = scmp.eq.s32.totalorder %s14, 1
    %p32 = por %p30, %p31
    %p33 = scmp.ne.s32.totalorder %s22, %s23
    %p34 = scmp.eq.s32.totalorder %s14, 0
    %p35 = por %p33, %p34
    %p36 = scmp.ne.s32.totalorder %s22, %s23
    %p37 = scmp.eq.s32.totalorder %s15, 1
    %p38 = por %p36, %p37
    %p40 = scmp.ne.s32.totalorder %s23, %s39
    %p41 = scmp.eq.s32.totalorder %s15, 0
    %p42 = por %p40, %p41
    %s44 = sadd.s32 %s43, 1
    %p47 = scmp.eq.s32.totalorder %s9, 1
    %p48 = scmp.ne.s32.totalorder %s43, %s45
    %p49 = scmp.eq.s32.totalorder %s9, 0
    %p50 = por %p48, %p49
    %p51 = scmp.ne.s32.totalorder %s43, %s45
    %p52 = scmp.eq.s32.totalorder %s14, 1
    %p53 = por %p51, %p52
    %p54 = scmp.ne.s32.totalorder %s45, %s46
    %p55 = scmp.eq.s32.totalorder %s14, 0
    %p56 = por %p54, %p55
    %p57 = scmp.ne.s32.totalorder %s45, %s46
    %p58 = scmp.eq.s32.totalorder %s15, 1
    %p59 = por %p57, %p58
    %p61 = scmp.ne.s32.totalorder %s46, %s60
    %p62 = scmp.eq.s32.totalorder %s15, 0
    %p63 = por %p61, %p62
    %s65 = sadd.s32 %s64, 1
    %p68 = scmp.eq.s32.totalorder %s9, 1
    %p69 = scmp.ne.s32.totalorder %s64, %s66
    %p70 = scmp.eq.s32.totalorder %s9, 0
    %p71 = por %p69, %p70
    %p72 = scmp.ne.s32.totalorder %s64, %s66
    %p73 = scmp.eq.s32.totalorder %s14, 1
    %p74 = por %p72, %p73
    %p75 = scmp.ne.s32.totalorder %s66, %s67
    %p76 = scmp.eq.s32.totalorder %s14, 0
    %p77 = por %p75, %p76
    %p78 = scmp.ne.s32.totalorder %s66, %s67
    %p79 = scmp.eq.s32.totalorder %s15, 1
    %p80 = por %p78, %p79
    %p82 = scmp.ne.s32.totalorder %s67, %s81
    %p83 = scmp.eq.s32.totalorder %s15, 0
    %p84 = por %p82, %p83
    %s85 = ssub.s32 %s9, %s16
    %p86 = scmp.eq.s32.totalorder %s85, 0
    %s88 = sadd.s32 %s87, 1
    %s89 = scalar_select %p86, %s87, %s88
    %p92 = pneg %p86
    %p93 = scmp.eq.s32.totalorder %s9, 1
    %p94 = por %p92, %p93
    %p95 = scmp.ne.s32.totalorder %s87, %s90
    %p96 = scmp.eq.s32.totalorder %s9, 0
    %p97 = por %p95, %p96
    %p98 = scmp.ne.s32.totalorder %s87, %s90
    %p99 = scmp.eq.s32.totalorder %s14, 1
    %p100 = por %p98, %p99
    %p101 = scmp.ne.s32.totalorder %s90, %s91
    %p102 = scmp.eq.s32.totalorder %s14, 0
    %p103 = por %p101, %p102
    %p104 = scmp.ne.s32.totalorder %s90, %s91
    %p105 = scmp.eq.s32.totalorder %s15, 1
    %p106 = por %p104, %p105
    %p108 = scmp.ne.s32.totalorder %s91, %s107
    %p109 = scmp.eq.s32.totalorder %s15, 0
    %p110 = por %p108, %p109
    %p111 = scmp.le.s32.totalorder 1, %s9
    %p112 = scmp.lt.s32.totalorder %s9, 3
    %p113 = pnand %p111, %p112
    %p114 = pneg %p113
    // Predicated region
    $region9: #{forward.6} parent=5 // pred_check
      _
    $region10: #{forward.6} parent=5 // pred_check_branch
      %116 = sbr.rel (%p113) target = $region12
    $region11: #{forward.6} parent=5 // pred_region
      %s117 = ssub.s32 %s9, 1
      // Predicated region
      $region13: #{forward.6} parent=11 // pred_check
        %p118 = pneg %p56
      $region14: #{forward.6} parent=11 // pred_check_branch
        %120 = sbr.rel (%p118) target = $region16
      $region15: #{forward.6} parent=11 // pred_region
        _
      $region16: #{forward.6} parent=11 // pred_fallthru
        _
      // Predicated region
      $region17: #{forward.6} parent=11 // pred_check
        %p121 = pneg %p77
      $region18: #{forward.6} parent=11 // pred_check_branch
        %123 = sbr.rel (%p121) target = $region20
      $region19: #{forward.6} parent=11 // pred_region
        _
      $region20: #{forward.6} parent=11 // pred_fallthru
        _
    $region12: #{forward.6} parent=5 // pred_fallthru
      _
    %p124 = scmp.lt.s32.totalorder %s9, 2
    // Predicated region
    $region21: #{forward.6} parent=5 // pred_check
      %p125 = pneg %p124
    $region22: #{forward.6} parent=5 // pred_check_branch
      %127 = sbr.rel (%p125) target = $region24
    $region23: #{forward.6} parent=5 // pred_region
      // Predicated region
      $region25: #{forward.6} parent=23 // pred_check
        %p128 = pneg %p29
      $region26: #{forward.6} parent=23 // pred_check_branch
        %130 = sbr.rel (%p128) target = $region28
      $region27: #{forward.6} parent=23 // pred_region
        %p131 = scmp.lt.s32.totalorder %s9, 1
        %s132 = scalar_select %p131, %s9, 1
        %s133 = smul.addr %s132, 8
        %s134 = scalar_lea.vmem %s0, %s133
      $region28: #{forward.6} parent=23 // pred_fallthru
        _
    $region24: #{forward.6} parent=5 // pred_fallthru
      _
    %p135 = scmp.le.s32.totalorder 1, %s9
    %p136 = scmp.lt.s32.totalorder %s9, 3
    %p137 = pnand %p135, %p136
    %p138 = pneg %p137
    // Predicated region
    $region29: #{forward.6} parent=5 // pred_check
      _
    $region30: #{forward.6} parent=5 // pred_check_branch
      %140 = sbr.rel (%p137) target = $region32
    $region31: #{forward.6} parent=5 // pred_region
      %s141 = ssub.s32 %s9, 1
      %p142 = scmp.lt.s32.totalorder %s14, 1
      %s143 = scalar_select %p142, %s14, 1
      %s144 = smul.addr %s143, 8
      %s145 = scalar_lea.vmem %s0, %s144
      %p146 = pneg %p35
      %p147 = pneg %p32
      %p148 = pneg %p56
      %p149 = pneg %p53
      %p150 = pneg %p77
      %p151 = pneg %p74
      %p152 = pneg %p103
      %p153 = pneg %p100
      %p154 = scmp.lt.s32.totalorder %s14, 1
      %s155 = scalar_select %p154, %s14, 1
      %s156 = smul.addr %s155, 2
      %s157 = smul.addr %s156, 8
      %s158 = scalar_lea.vmem %s3, %s157
      %p159 = scmp.lt.s32.totalorder %s14, 1
      %s160 = scalar_select %p159, %s14, 1
      %s161 = smul.addr %s160, 8
      %s162 = scalar_lea.vmem %s0, %s161
      %p163 = scmp.lt.s32.totalorder %s14, 1
      %s164 = scalar_select %p163, %s14, 1
      %s165 = smul.addr %s164, 2
      %s166 = smul.addr %s165, 8
      %s167 = scalar_lea.vmem %s3, %s166
      %v168 = vld [vmem:[%s162] sm:$0xff]
      %v169 = vld [vmem:[%s1] sm:$0x1]
      %v170 = vmul.f32 %v168, %v168
      %vm171 = vcmask 261120
      %v172 = vsel %vm171, %v170, 0.0
      %173 = vadd.xlane.f32.xlu0 %v172
      %v174 = vpop.xlane.xlu0 %173
      %v175 = vrcp.pop 32.0
      %v176 = vmul.f32 32.0, %v175
      %v177 = vsub.f32 1.0, %v176
      %v178 = vmul.f32 %v175, %v177
      %v179 = vadd.f32 %v175, %v178
      %vm180 = vweird.f32 %v175
      %v181 = vsel %vm180, %v175, %v179
      %v182 = vmul.f32 %v174, %v181
      %v183 = vadd.f32 %v182, 1e-05
      %v184 = vrsqrt.pop %v183
      %v185 = vmul.f32 %v184, %v183
      %v186 = vmul.f32 %v185, %v184
      %v187 = vmul.f32 0.5, %v186
      %v188 = vsub.f32 1.5, %v187
      %v189 = vmul.f32 %v184, %v188
      %vm190 = vweird.f32 %v183
      %vm191 = vweird.f32 %v184
      %vm192 = vmor %vm190, %vm191
      %v193 = vsel %vm192, %v184, %v189
      %v194 = vmul.f32 %v168, %v193
      %v196 = vperm.slane %v169, 0
      %v198 = vmul.f32 %v194, %v196
      %v199 = vpack.c.bf16 %v198, %v198
      %v200 = vld [vmem:[%s2] sm:$0xff]
      %v201 = vld [vmem:[%s2 + $0x8] sm:$0xff]
      %v202 = vld [vmem:[%s2 + $0x10] sm:$0xff]
      %v203 = vld [vmem:[%s2 + $0x18] sm:$0xff]
      %v204 = vld [vmem:[%s2 + $0x20] sm:$0xff]
      %v205 = vld [vmem:[%s2 + $0x28] sm:$0xff]
      %v206 = vld [vmem:[%s2 + $0x30] sm:$0xff]
      %v207 = vld [vmem:[%s2 + $0x38] sm:$0xff]
      %v208 = vld [vmem:[%s2 + $0x40] sm:$0xff]
      %v209 = vld [vmem:[%s2 + $0x48] sm:$0xff]
      %v210 = vld [vmem:[%s2 + $0x50] sm:$0xff]
      %v211 = vld [vmem:[%s2 + $0x58] sm:$0xff]
      %v212 = vld [vmem:[%s2 + $0x60] sm:$0xff]
      %v213 = vld [vmem:[%s2 + $0x68] sm:$0xff]
      %v214 = vld [vmem:[%s2 + $0x70] sm:$0xff]
      %v215 = vld [vmem:[%s2 + $0x78] sm:$0xff]
      %v216 = vld [vmem:[%s2 + $0x80] sm:$0xff]
      %v217 = vld [vmem:[%s2 + $0x88] sm:$0xff]
      %v218 = vld [vmem:[%s2 + $0x90] sm:$0xff]
      %v219 = vld [vmem:[%s2 + $0x98] sm:$0xff]
      %v220 = vld [vmem:[%s2 + $0xa0] sm:$0xff]
      %v221 = vld [vmem:[%s2 + $0xa8] sm:$0xff]
      %v222 = vld [vmem:[%s2 + $0xb0] sm:$0xff]
      %v223 = vld [vmem:[%s2 + $0xb8] sm:$0xff]
      %v224 = vld [vmem:[%s2 + $0xc0] sm:$0xff]
      %v225 = vld [vmem:[%s2 + $0xc8] sm:$0xff]
      %v226 = vld [vmem:[%s2 + $0xd0] sm:$0xff]
      %v227 = vld [vmem:[%s2 + $0xd8] sm:$0xff]
      %v228 = vld [vmem:[%s2 + $0xe0] sm:$0xff]
      %v229 = vld [vmem:[%s2 + $0xe8] sm:$0xff]
      %v230 = vld [vmem:[%s2 + $0xf0] sm:$0xff]
      %v231 = vld [vmem:[%s2 + $0xf8] sm:$0xff]
      %v232 = vpack.c.bf16 %v201, %v200
      %v233 = vpack.c.bf16 %v203, %v202
      %v234 = vpack.c.bf16 %v205, %v204
      %v235 = vpack.c.bf16 %v207, %v206
      %v236 = vpack.c.bf16 %v209, %v208
      %v237 = vpack.c.bf16 %v211, %v210
      %v238 = vpack.c.bf16 %v213, %v212
      %v239 = vpack.c.bf16 %v215, %v214
      %v240 = vpack.c.bf16 %v217, %v216
      %v241 = vpack.c.bf16 %v219, %v218
      %v242 = vpack.c.bf16 %v221, %v220
      %v243 = vpack.c.bf16 %v223, %v222
      %v244 = vpack.c.bf16 %v225, %v224
      %v245 = vpack.c.bf16 %v227, %v226
      %v246 = vpack.c.bf16 %v229, %v228
      %v247 = vpack.c.bf16 %v231, %v230
      %v249 = vsel %vm171, %v199, 0
      %v252 = vsel %vm171, %v232, 0
      %v255 = vsel %vm171, %v233, 0
      %v258 = vsel %vm171, %v234, 0
      %v261 = vsel %vm171, %v235, 0
      %v264 = vsel %vm171, %v236, 0
      %v267 = vsel %vm171, %v237, 0
      %v270 = vsel %vm171, %v238, 0
      %v273 = vsel %vm171, %v239, 0
      %v276 = vsel %vm171, %v240, 0
      %v279 = vsel %vm171, %v241, 0
      %v282 = vsel %vm171, %v242, 0
      %v285 = vsel %vm171, %v243, 0
      %v288 = vsel %vm171, %v244, 0
      %v291 = vsel %vm171, %v245, 0
      %v294 = vsel %vm171, %v246, 0
      %v297 = vsel %vm171, %v247, 0
      %299 = vmatpush.bf16.xpose.msra.mxu0 %v273
      %300 = vmatpush.bf16.xpose.msra.mxu0 %v270
      %301 = vmatpush.bf16.xpose.msra.mxu0 %v267
      %302 = vmatpush.bf16.xpose.msra.mxu0 %v264
      %303 = vmatpush.bf16.xpose.msra.mxu0 %v261
      %304 = vmatpush.bf16.xpose.msra.mxu0 %v258
      %305 = vmatpush.bf16.xpose.msra.mxu0 %v255
      %306 = vmatpush.bf16.xpose.msra.mxu0 %v252
      %307 = vmatmul.bf16.gmra.mxu0 %v249
      %v308 = vpop.f32.mrf.mxu0
      %v309 = vadd.f32 0.0, %v308
      %v310 = vpop.f32.mrf.mxu0
      %311 = vdwg.mxu0
      %312 = vmatpush.bf16.xpose.msra.mxu0 %v297
      %313 = vmatpush.bf16.xpose.msra.mxu0 %v294
      %314 = vmatpush.bf16.xpose.msra.mxu0 %v291
      %315 = vmatpush.bf16.xpose.msra.mxu0 %v288
      %316 = vmatpush.bf16.xpose.msra.mxu0 %v285
      %317 = vmatpush.bf16.xpose.msra.mxu0 %v282
      %318 = vmatpush.bf16.xpose.msra.mxu0 %v279
      %319 = vmatpush.bf16.xpose.msra.mxu0 %v276
      %320 = vmatmul.bf16.gmra.mxu0 %v249
      %v321 = vpop.f32.mrf.mxu0
      %v322 = vadd.f32 0.0, %v321
      %v323 = vpop.f32.mrf.mxu0
      %324 = vdwg.mxu0
      %325 = vst [vmem:[%s167] sm:$0xff] %v309
      %326 = vst [vmem:[%s167 + $0x8] sm:$0xff] %v322
      %p327 = scmp.lt.s32.totalorder %s14, 1
      %s328 = scalar_select %p327, %s14, 1
      %s329 = smul.addr %s328, 2
      %s330 = smul.addr %s329, 8
      %s331 = scalar_lea.vmem %s3, %s330
      // Predicated region
      $region33: #{forward.6} parent=31 // pred_check
        %p332 = pneg %p100
      $region34: #{forward.6} parent=31 // pred_check_branch
        %334 = sbr.rel (%p332) target = $region36
      $region35: #{forward.6} parent=31 // pred_region
        _
      $region36: #{forward.6} parent=31 // pred_fallthru
        _
    $region32: #{forward.6} parent=5 // pred_fallthru
      _
    %p335 = scmp.le.s32.totalorder 2, %s9
    // Predicated region
    $region37: #{forward.6} parent=5 // pred_check
      %p336 = pneg %p335
    $region38: #{forward.6} parent=5 // pred_check_branch
      %338 = sbr.rel (%p336) target = $region40
    $region39: #{forward.6} parent=5 // pred_region
      %s339 = ssub.s32 %s9, 2
      // Predicated region
      $region41: #{forward.6} parent=39 // pred_check
        %p340 = pneg %p106
      $region42: #{forward.6} parent=39 // pred_check_branch
        %342 = sbr.rel (%p340) target = $region44
      $region43: #{forward.6} parent=39 // pred_region
        %p343 = scmp.lt.s32.totalorder %s15, 1
        %s344 = scalar_select %p343, %s15, 1
        %s345 = smul.addr %s344, 2
        %s346 = smul.addr %s345, 8
        %s347 = scalar_lea.vmem %s3, %s346
      $region44: #{forward.6} parent=39 // pred_fallthru
        _
    $region40: #{forward.6} parent=5 // pred_fallthru
      _
  $region6: #{forward.6} parent=0 // loop_footer
    %s13 = sadd.s32 1, %s9
  $region7: #{forward.6} parent=0 // loop_footer_branch
    %8 = sbr.rel target = $region3
  $region8: #{forward.6} parent=0 // loop_exit
    _

// kernel: forward.4
$region0: #{forward.4}
  #allocation0 [shape = 'u32[]', space=smem, size = 0x4, offset = 0x4, fixed_abs, tag = 'smem constant byte address 0x4 - core index']
  #allocation1 [shape = 'u32[72,128]{1,0:T(1,128)}', space=vmem, size = 0x9000, scoped, tag = 'internal scratch']
  %s0 = inlined_call_operand.vmem [shape: f32[16,32], index: 0, kind: input, shape index: {}, may-alias: {0,13}]
  %s1 = inlined_call_operand.vmem [shape: f32[1,32], index: 1, kind: input, shape index: {}]
  %s2 = inlined_call_operand.vmem [shape: f32[32,32], index: 2, kind: input, shape index: {}]
  %s3 = inlined_call_operand.vmem [shape: f32[32,32], index: 3, kind: input, shape index: {}]
  %s4 = inlined_call_operand.vmem [shape: f32[32,32], index: 4, kind: input, shape index: {}]
  %s5 = inlined_call_operand.vmem [shape: f32[32,32], index: 5, kind: input, shape index: {}]
  %s6 = inlined_call_operand.vmem [shape: f32[1,32], index: 6, kind: input, shape index: {}]
  %s7 = inlined_call_operand.vmem [shape: f32[96,32], index: 7, kind: input, shape index: {}]
  %s8 = inlined_call_operand.vmem [shape: f32[96,32], index: 8, kind: input, shape index: {}]
  %s9 = inlined_call_operand.vmem [shape: f32[32,96], index: 9, kind: input, shape index: {}]
  %s10 = inlined_call_operand.vmem [shape: f32[8,32], index: 10, kind: input, shape index: {}]
  %s11 = inlined_call_operand.vmem [shape: f32[8,32], index: 11, kind: input, shape index: {}]
  %s12 = inlined_call_operand.vmem [shape: f32[32,32], index: 12, kind: input, shape index: {}]
  %s13 = inlined_call_operand.vmem [shape: f32[16,32], index: 13, kind: output, shape index: {}, may-alias: {0,13}]
  %s14 = sld [smem:[#allocation0]]
  $region85: #{forward.4} parent=0
    _
  %s16 = ssub.s32 1, %s14
  %s17 = scalar_select 0, %s16, %s14
  loop: start=0, step=1, limit=4
  $region2: #{forward.4} parent=0 // loop_pre_header
    _
  $region3: #{forward.4} parent=0 // loop_header
    %s19 = sphi 0, %s23
    %p20 = scmp.ge.s32.totalorder %s19, 4
    %s29 = sphi 0, %s31
    %s32 = sphi 0, %s29
    %s33 = sphi 0, %s32
    %s49 = sphi 0, %s33
    %s53 = sphi 0, %s53
    %s55 = sphi 0, %s53
    %s56 = sphi 0, %s55
    %s70 = sphi 0, %s56
    %s74 = sphi 0, %s74
    %s76 = sphi 0, %s74
    %s77 = sphi 0, %s76
    %s91 = sphi 0, %s77
    %s95 = sphi 0, %s95
    %s97 = sphi 0, %s95
    %s98 = sphi 0, %s97
    %s112 = sphi 0, %s98
    %s116 = sphi 0, %s116
    %s118 = sphi 0, %s116
    %s119 = sphi 0, %s118
    %s133 = sphi 0, %s119
    %s137 = sphi 0, %s137
    %s139 = sphi 0, %s137
    %s140 = sphi 0, %s139
    %s154 = sphi 0, %s140
    %s158 = sphi 0, %s158
    %s160 = sphi 0, %s158
    %s161 = sphi 0, %s160
    %s175 = sphi 0, %s161
    %s179 = sphi 0, %s179
    %s181 = sphi 0, %s179
    %s182 = sphi 0, %s181
    %s196 = sphi 0, %s182
    %s200 = sphi 0, %s200
    %s202 = sphi 0, %s200
    %s203 = sphi 0, %s202
    %s217 = sphi 0, %s203
    %s221 = sphi 0, %s221
    %s223 = sphi 0, %s221
    %s224 = sphi 0, %s223
    %s238 = sphi 0, %s224
    %s242 = sphi 0, %s242
    %s244 = sphi 0, %s242
    %s245 = sphi 0, %s244
    %s259 = sphi 0, %s245
    %s263 = sphi 0, %s263
    %s265 = sphi 0, %s263
    %s266 = sphi 0, %s265
    %s280 = sphi 0, %s266
    %s284 = sphi 0, %s284
    %s286 = sphi 0, %s284
    %s287 = sphi 0, %s286
    %s301 = sphi 0, %s287
    %s307 = sphi 0, %s309
    %s310 = sphi 0, %s307
    %s311 = sphi 0, %s310
    %s327 = sphi 0, %s311
  $region4: #{forward.4} parent=0 // loop_header_branch
    %22 = sbr.rel (%p20) target = $region8
  $region5: #{forward.4} parent=0 // loop_body
    %s24 = ssub.s32 %s19, 1
    %s25 = ssub.s32 %s19, 2
    %s26 = sadd.s32 %s19, 1
    %s27 = ssub.s32 %s19, %s26
    %p28 = scmp.eq.s32.totalorder %s27, 0
    %s30 = sadd.s32 %s29, 1
    %s31 = scalar_select %p28, %s29, %s30
    %p34 = pneg %p28
    %p35 = scmp.eq.s32.totalorder %s19, 1
    %p36 = por %p34, %p35
    %p37 = scmp.ne.s32.totalorder %s29, %s32
    %p38 = scmp.eq.s32.totalorder %s19, 0
    %p39 = por %p37, %p38
    %p40 = scmp.ne.s32.totalorder %s29, %s32
    %p41 = scmp.eq.s32.totalorder %s24, 1
    %p42 = por %p40, %p41
    %p43 = scmp.ne.s32.totalorder %s32, %s33
    %p44 = scmp.eq.s32.totalorder %s24, 0
    %p45 = por %p43, %p44
    %p46 = scmp.ne.s32.totalorder %s32, %s33
    %p47 = scmp.eq.s32.totalorder %s25, 1
    %p48 = por %p46, %p47
    %p50 = scmp.ne.s32.totalorder %s33, %s49
    %p51 = scmp.eq.s32.totalorder %s25, 0
    %p52 = por %p50, %p51
    %s54 = sadd.s32 %s53, 1
    %p57 = scmp.eq.s32.totalorder %s19, 1
    %p58 = scmp.ne.s32.totalorder %s53, %s55
    %p59 = scmp.eq.s32.totalorder %s19, 0
    %p60 = por %p58, %p59
    %p61 = scmp.ne.s32.totalorder %s53, %s55
    %p62 = scmp.eq.s32.totalorder %s24, 1
    %p63 = por %p61, %p62
    %p64 = scmp.ne.s32.totalorder %s55, %s56
    %p65 = scmp.eq.s32.totalorder %s24, 0
    %p66 = por %p64, %p65
    %p67 = scmp.ne.s32.totalorder %s55, %s56
    %p68 = scmp.eq.s32.totalorder %s25, 1
    %p69 = por %p67, %p68
    %p71 = scmp.ne.s32.totalorder %s56, %s70
    %p72 = scmp.eq.s32.totalorder %s25, 0
    %p73 = por %p71, %p72
    %s75 = sadd.s32 %s74, 1
    %p78 = scmp.eq.s32.totalorder %s19, 1
    %p79 = scmp.ne.s32.totalorder %s74, %s76
    %p80 = scmp.eq.s32.totalorder %s19, 0
    %p81 = por %p79, %p80
    %p82 = scmp.ne.s32.totalorder %s74, %s76
    %p83 = scmp.eq.s32.totalorder %s24, 1
    %p84 = por %p82, %p83
    %p85 = scmp.ne.s32.totalorder %s76, %s77
    %p86 = scmp.eq.s32.totalorder %s24, 0
    %p87 = por %p85, %p86
    %p88 = scmp.ne.s32.totalorder %s76, %s77
    %p89 = scmp.eq.s32.totalorder %s25, 1
    %p90 = por %p88, %p89
    %p92 = scmp.ne.s32.totalorder %s77, %s91
    %p93 = scmp.eq.s32.totalorder %s25, 0
    %p94 = por %p92, %p93
    %s96 = sadd.s32 %s95, 1
    %p99 = scmp.eq.s32.totalorder %s19, 1
    %p100 = scmp.ne.s32.totalorder %s95, %s97
    %p101 = scmp.eq.s32.totalorder %s19, 0
    %p102 = por %p100, %p101
    %p103 = scmp.ne.s32.totalorder %s95, %s97
    %p104 = scmp.eq.s32.totalorder %s24, 1
    %p105 = por %p103, %p104
    %p106 = scmp.ne.s32.totalorder %s97, %s98
    %p107 = scmp.eq.s32.totalorder %s24, 0
    %p108 = por %p106, %p107
    %p109 = scmp.ne.s32.totalorder %s97, %s98
    %p110 = scmp.eq.s32.totalorder %s25, 1
    %p111 = por %p109, %p110
    %p113 = scmp.ne.s32.totalorder %s98, %s112
    %p114 = scmp.eq.s32.totalorder %s25, 0
    %p115 = por %p113, %p114
    %s117 = sadd.s32 %s116, 1
    %p120 = scmp.eq.s32.totalorder %s19, 1
    %p121 = scmp.ne.s32.totalorder %s116, %s118
    %p122 = scmp.eq.s32.totalorder %s19, 0
    %p123 = por %p121, %p122
    %p124 = scmp.ne.s32.totalorder %s116, %s118
    %p125 = scmp.eq.s32.totalorder %s24, 1
    %p126 = por %p124, %p125
    %p127 = scmp.ne.s32.totalorder %s118, %s119
    %p128 = scmp.eq.s32.totalorder %s24, 0
    %p129 = por %p127, %p128
    %p130 = scmp.ne.s32.totalorder %s118, %s119
    %p131 = scmp.eq.s32.totalorder %s25, 1
    %p132 = por %p130, %p131
    %p134 = scmp.ne.s32.totalorder %s119, %s133
    %p135 = scmp.eq.s32.totalorder %s25, 0
    %p136 = por %p134, %p135
    %s138 = sadd.s32 %s137, 1
    %p141 = scmp.eq.s32.totalorder %s19, 1
    %p142 = scmp.ne.s32.totalorder %s137, %s139
    %p143 = scmp.eq.s32.totalorder %s19, 0
    %p144 = por %p142, %p143
    %p145 = scmp.ne.s32.totalorder %s137, %s139
    %p146 = scmp.eq.s32.totalorder %s24, 1
    %p147 = por %p145, %p146
    %p148 = scmp.ne.s32.totalorder %s139, %s140
    %p149 = scmp.eq.s32.totalorder %s24, 0
    %p150 = por %p148, %p149
    %p151 = scmp.ne.s32.totalorder %s139, %s140
    %p152 = scmp.eq.s32.totalorder %s25, 1
    %p153 = por %p151, %p152
    %p155 = scmp.ne.s32.totalorder %s140, %s154
    %p156 = scmp.eq.s32.totalorder %s25, 0
    %p157 = por %p155, %p156
    %s159 = sadd.s32 %s158, 1
    %p162 = scmp.eq.s32.totalorder %s19, 1
    %p163 = scmp.ne.s32.totalorder %s158, %s160
    %p164 = scmp.eq.s32.totalorder %s19, 0
    %p165 = por %p163, %p164
    %p166 = scmp.ne.s32.totalorder %s158, %s160
    %p167 = scmp.eq.s32.totalorder %s24, 1
    %p168 = por %p166, %p167
    %p169 = scmp.ne.s32.totalorder %s160, %s161
    %p170 = scmp.eq.s32.totalorder %s24, 0
    %p171 = por %p169, %p170
    %p172 = scmp.ne.s32.totalorder %s160, %s161
    %p173 = scmp.eq.s32.totalorder %s25, 1
    %p174 = por %p172, %p173
    %p176 = scmp.ne.s32.totalorder %s161, %s175
    %p177 = scmp.eq.s32.totalorder %s25, 0
    %p178 = por %p176, %p177
    %s180 = sadd.s32 %s179, 1
    %p183 = scmp.eq.s32.totalorder %s19, 1
    %p184 = scmp.ne.s32.totalorder %s179, %s181
    %p185 = scmp.eq.s32.totalorder %s19, 0
    %p186 = por %p184, %p185
    %p187 = scmp.ne.s32.totalorder %s179, %s181
    %p188 = scmp.eq.s32.totalorder %s24, 1
    %p189 = por %p187, %p188
    %p190 = scmp.ne.s32.totalorder %s181, %s182
    %p191 = scmp.eq.s32.totalorder %s24, 0
    %p192 = por %p190, %p191
    %p193 = scmp.ne.s32.totalorder %s181, %s182
    %p194 = scmp.eq.s32.totalorder %s25, 1
    %p195 = por %p193, %p194
    %p197 = scmp.ne.s32.totalorder %s182, %s196
    %p198 = scmp.eq.s32.totalorder %s25, 0
    %p199 = por %p197, %p198
    %s201 = sadd.s32 %s200, 1
    %p204 = scmp.eq.s32.totalorder %s19, 1
    %p205 = scmp.ne.s32.totalorder %s200, %s202
    %p206 = scmp.eq.s32.totalorder %s19, 0
    %p207 = por %p205, %p206
    %p208 = scmp.ne.s32.totalorder %s200, %s202
    %p209 = scmp.eq.s32.totalorder %s24, 1
    %p210 = por %p208, %p209
    %p211 = scmp.ne.s32.totalorder %s202, %s203
    %p212 = scmp.eq.s32.totalorder %s24, 0
    %p213 = por %p211, %p212
    %p214 = scmp.ne.s32.totalorder %s202, %s203
    %p215 = scmp.eq.s32.totalorder %s25, 1
    %p216 = por %p214, %p215
    %p218 = scmp.ne.s32.totalorder %s203, %s217
    %p219 = scmp.eq.s32.totalorder %s25, 0
    %p220 = por %p218, %p219
    %s222 = sadd.s32 %s221, 1
    %p225 = scmp.eq.s32.totalorder %s19, 1
    %p226 = scmp.ne.s32.totalorder %s221, %s223
    %p227 = scmp.eq.s32.totalorder %s19, 0
    %p228 = por %p226, %p227
    %p229 = scmp.ne.s32.totalorder %s221, %s223
    %p230 = scmp.eq.s32.totalorder %s24, 1
    %p231 = por %p229, %p230
    %p232 = scmp.ne.s32.totalorder %s223, %s224
    %p233 = scmp.eq.s32.totalorder %s24, 0
    %p234 = por %p232, %p233
    %p235 = scmp.ne.s32.totalorder %s223, %s224
    %p236 = scmp.eq.s32.totalorder %s25, 1
    %p237 = por %p235, %p236
    %p239 = scmp.ne.s32.totalorder %s224, %s238
    %p240 = scmp.eq.s32.totalorder %s25, 0
    %p241 = por %p239, %p240
    %s243 = sadd.s32 %s242, 1
    %p246 = scmp.eq.s32.totalorder %s19, 1
    %p247 = scmp.ne.s32.totalorder %s242, %s244
    %p248 = scmp.eq.s32.totalorder %s19, 0
    %p249 = por %p247, %p248
    %p250 = scmp.ne.s32.totalorder %s242, %s244
    %p251 = scmp.eq.s32.totalorder %s24, 1
    %p252 = por %p250, %p251
    %p253 = scmp.ne.s32.totalorder %s244, %s245
    %p254 = scmp.eq.s32.totalorder %s24, 0
    %p255 = por %p253, %p254
    %p256 = scmp.ne.s32.totalorder %s244, %s245
    %p257 = scmp.eq.s32.totalorder %s25, 1
    %p258 = por %p256, %p257
    %p260 = scmp.ne.s32.totalorder %s245, %s259
    %p261 = scmp.eq.s32.totalorder %s25, 0
    %p262 = por %p260, %p261
    %s264 = sadd.s32 %s263, 1
    %p267 = scmp.eq.s32.totalorder %s19, 1
    %p268 = scmp.ne.s32.totalorder %s263, %s265
    %p269 = scmp.eq.s32.totalorder %s19, 0
    %p270 = por %p268, %p269
    %p271 = scmp.ne.s32.totalorder %s263, %s265
    %p272 = scmp.eq.s32.totalorder %s24, 1
    %p273 = por %p271, %p272
    %p274 = scmp.ne.s32.totalorder %s265, %s266
    %p275 = scmp.eq.s32.totalorder %s24, 0
    %p276 = por %p274, %p275
    %p277 = scmp.ne.s32.totalorder %s265, %s266
    %p278 = scmp.eq.s32.totalorder %s25, 1
    %p279 = por %p277, %p278
    %p281 = scmp.ne.s32.totalorder %s266, %s280
    %p282 = scmp.eq.s32.totalorder %s25, 0
    %p283 = por %p281, %p282
    %s285 = sadd.s32 %s284, 1
    %p288 = scmp.eq.s32.totalorder %s19, 1
    %p289 = scmp.ne.s32.totalorder %s284, %s286
    %p290 = scmp.eq.s32.totalorder %s19, 0
    %p291 = por %p289, %p290
    %p292 = scmp.ne.s32.totalorder %s284, %s286
    %p293 = scmp.eq.s32.totalorder %s24, 1
    %p294 = por %p292, %p293
    %p295 = scmp.ne.s32.totalorder %s286, %s287
    %p296 = scmp.eq.s32.totalorder %s24, 0
    %p297 = por %p295, %p296
    %p298 = scmp.ne.s32.totalorder %s286, %s287
    %p299 = scmp.eq.s32.totalorder %s25, 1
    %p300 = por %p298, %p299
    %p302 = scmp.ne.s32.totalorder %s287, %s301
    %p303 = scmp.eq.s32.totalorder %s25, 0
    %p304 = por %p302, %p303
    %s305 = ssub.s32 %s19, %s26
    %p306 = scmp.eq.s32.totalorder %s305, 0
    %s308 = sadd.s32 %s307, 1
    %s309 = scalar_select %p306, %s307, %s308
    %p312 = pneg %p306
    %p313 = scmp.eq.s32.totalorder %s19, 1
    %p314 = por %p312, %p313
    %p315 = scmp.ne.s32.totalorder %s307, %s310
    %p316 = scmp.eq.s32.totalorder %s19, 0
    %p317 = por %p315, %p316
    %p318 = scmp.ne.s32.totalorder %s307, %s310
    %p319 = scmp.eq.s32.totalorder %s24, 1
    %p320 = por %p318, %p319
    %p321 = scmp.ne.s32.totalorder %s310, %s311
    %p322 = scmp.eq.s32.totalorder %s24, 0
    %p323 = por %p321, %p322
    %p324 = scmp.ne.s32.totalorder %s310, %s311
    %p325 = scmp.eq.s32.totalorder %s25, 1
    %p326 = por %p324, %p325
    %p328 = scmp.ne.s32.totalorder %s311, %s327
    %p329 = scmp.eq.s32.totalorder %s25, 0
    %p330 = por %p328, %p329
    %p331 = scmp.le.s32.totalorder 1, %s19
    %p332 = scmp.lt.s32.totalorder %s19, 3
    %p333 = pnand %p331, %p332
    %p334 = pneg %p333
    // Predicated region
    $region9: #{forward.4} parent=5 // pred_check
      _
    $region10: #{forward.4} parent=5 // pred_check_branch
      %336 = sbr.rel (%p333) target = $region12
    $region11: #{forward.4} parent=5 // pred_region
      %s337 = ssub.s32 %s19, 1
      // Predicated region
      $region13: #{forward.4} parent=11 // pred_check
        %p338 = pneg %p66
      $region14: #{forward.4} parent=11 // pred_check_branch
        %340 = sbr.rel (%p338) target = $region16
      $region15: #{forward.4} parent=11 // pred_region
        _
      $region16: #{forward.4} parent=11 // pred_fallthru
        _
      // Predicated region
      $region17: #{forward.4} parent=11 // pred_check
        %p341 = pneg %p87
      $region18: #{forward.4} parent=11 // pred_check_branch
        %343 = sbr.rel (%p341) target = $region20
      $region19: #{forward.4} parent=11 // pred_region
        _
      $region20: #{forward.4} parent=11 // pred_fallthru
        _
      // Predicated region
      $region21: #{forward.4} parent=11 // pred_check
        %p344 = pneg %p108
      $region22: #{forward.4} parent=11 // pred_check_branch
        %346 = sbr.rel (%p344) target = $region24
      $region23: #{forward.4} parent=11 // pred_region
        _
      $region24: #{forward.4} parent=11 // pred_fallthru
        _
      // Predicated region
      $region25: #{forward.4} parent=11 // pred_check
        %p347 = pneg %p129
      $region26: #{forward.4} parent=11 // pred_check_branch
        %349 = sbr.rel (%p347) target = $region28
      $region27: #{forward.4} parent=11 // pred_region
        _
      $region28: #{forward.4} parent=11 // pred_fallthru
        _
      // Predicated region
      $region29: #{forward.4} parent=11 // pred_check
        %p350 = pneg %p150
      $region30: #{forward.4} parent=11 // pred_check_branch
        %352 = sbr.rel (%p350) target = $region32
      $region31: #{forward.4} parent=11 // pred_region
        _
      $region32: #{forward.4} parent=11 // pred_fallthru
        _
      // Predicated region
      $region33: #{forward.4} parent=11 // pred_check
        %p353 = pneg %p171
      $region34: #{forward.4} parent=11 // pred_check_branch
        %355 = sbr.rel (%p353) target = $region36
      $region35: #{forward.4} parent=11 // pred_region
        _
      $region36: #{forward.4} parent=11 // pred_fallthru
        _
      // Predicated region
      $region37: #{forward.4} parent=11 // pred_check
        %p356 = pneg %p192
      $region38: #{forward.4} parent=11 // pred_check_branch
        %358 = sbr.rel (%p356) target = $region40
      $region39: #{forward.4} parent=11 // pred_region
        _
      $region40: #{forward.4} parent=11 // pred_fallthru
        _
      // Predicated region
      $region41: #{forward.4} parent=11 // pred_check
        %p359 = pneg %p213
      $region42: #{forward.4} parent=11 // pred_check_branch
        %361 = sbr.rel (%p359) target = $region44
      $region43: #{forward.4} parent=11 // pred_region
        _
      $region44: #{forward.4} parent=11 // pred_fallthru
        _
      // Predicated region
      $region45: #{forward.4} parent=11 // pred_check
        %p362 = pneg %p234
      $region46: #{forward.4} parent=11 // pred_check_branch
        %364 = sbr.rel (%p362) target = $region48
      $region47: #{forward.4} parent=11 // pred_region
        _
      $region48: #{forward.4} parent=11 // pred_fallthru
        _
      // Predicated region
      $region49: #{forward.4} parent=11 // pred_check
        %p365 = pneg %p255
      $region50: #{forward.4} parent=11 // pred_check_branch
        %367 = sbr.rel (%p365) target = $region52
      $region51: #{forward.4} parent=11 // pred_region
        _
      $region52: #{forward.4} parent=11 // pred_fallthru
        _
      // Predicated region
      $region53: #{forward.4} parent=11 // pred_check
        %p368 = pneg %p276
      $region54: #{forward.4} parent=11 // pred_check_branch
        %370 = sbr.rel (%p368) target = $region56
      $region55: #{forward.4} parent=11 // pred_region
        _
      $region56: #{forward.4} parent=11 // pred_fallthru
        _
      // Predicated region
      $region57: #{forward.4} parent=11 // pred_check
        %p371 = pneg %p297
      $region58: #{forward.4} parent=11 // pred_check_branch
        %373 = sbr.rel (%p371) target = $region60
      $region59: #{forward.4} parent=11 // pred_region
        _
      $region60: #{forward.4} parent=11 // pred_fallthru
        _
    $region12: #{forward.4} parent=5 // pred_fallthru
      _
    %p374 = scmp.lt.s32.totalorder %s19, 2
    // Predicated region
    $region61: #{forward.4} parent=5 // pred_check
      %p375 = pneg %p374
    $region62: #{forward.4} parent=5 // pred_check_branch
      %377 = sbr.rel (%p375) target = $region64
    $region63: #{forward.4} parent=5 // pred_region
      // Predicated region
      $region65: #{forward.4} parent=63 // pred_check
        %p378 = pneg %p39
      $region66: #{forward.4} parent=63 // pred_check_branch
        %380 = sbr.rel (%p378) target = $region68
      $region67: #{forward.4} parent=63 // pred_region
        %p381 = scmp.lt.s32.totalorder %s19, 1
        %s382 = scalar_select %p381, %s19, 1
        %s383 = smul.addr %s382, 8
        %s384 = scalar_lea.vmem %s0, %s383
      $region68: #{forward.4} parent=63 // pred_fallthru
        _
    $region64: #{forward.4} parent=5 // pred_fallthru
      _
    %p385 = scmp.le.s32.totalorder 1, %s19
    %p386 = scmp.lt.s32.totalorder %s19, 3
    %p387 = pnand %p385, %p386
    %p388 = pneg %p387
    // Predicated region
    $region69: #{forward.4} parent=5 // pred_check
      _
    $region70: #{forward.4} parent=5 // pred_check_branch
      %390 = sbr.rel (%p387) target = $region72
    $region71: #{forward.4} parent=5 // pred_region
      %s391 = ssub.s32 %s19, 1
      %p392 = scmp.lt.s32.totalorder %s24, 1
      %s393 = scalar_select %p392, %s24, 1
      %s394 = smul.addr %s393, 8
      %s395 = scalar_lea.vmem %s0, %s394
      %p396 = pneg %p45
      %p397 = pneg %p42
      %p398 = pneg %p66
      %p399 = pneg %p63
      %p400 = pneg %p87
      %p401 = pneg %p84
      %p402 = pneg %p108
      %p403 = pneg %p105
      %p404 = pneg %p129
      %p405 = pneg %p126
      %p406 = pneg %p150
      %p407 = pneg %p147
      %p408 = pneg %p171
      %p409 = pneg %p168
      %p410 = pneg %p192
      %p411 = pneg %p189
      %p412 = pneg %p213
      %p413 = pneg %p210
      %p414 = pneg %p234
      %p415 = pneg %p231
      %p416 = pneg %p255
      %p417 = pneg %p252
      %p418 = pneg %p276
      %p419 = pneg %p273
      %p420 = pneg %p297
      %p421 = pneg %p294
      %p422 = pneg %p323
      %p423 = pneg %p320
      %p424 = scmp.lt.s32.totalorder %s24, 1
      %s425 = scalar_select %p424, %s24, 1
      %s426 = smul.addr %s425, 8
      %s427 = scalar_lea.vmem %s13, %s426
      %p428 = scmp.lt.s32.totalorder %s24, 1
      %s429 = scalar_select %p428, %s24, 1
      %s430 = smul.addr %s429, 8
      %s431 = scalar_lea.vmem %s0, %s430
      %p432 = scmp.lt.s32.totalorder %s24, 1
      %s433 = scalar_select %p432, %s24, 1
      %s434 = smul.addr %s433, 8
      %s435 = scalar_lea.vmem %s13, %s434
      %v437 = vld [vmem:[%s431] sm:$0xff]
      %v438 = vld [vmem:[%s1] sm:$0x1]
      %v439 = vmul.f32 %v437, %v437
      %vm440 = vcmask 261120
      %v441 = vsel %vm440, %v439, 0.0
      %442 = vadd.xlane.f32.xlu0 %v441
      %v443 = vpop.xlane.xlu0 %442
      %v444 = vrcp.pop 32.0
      %v445 = vmul.f32 32.0, %v444
      %v446 = vsub.f32 1.0, %v445
      %v447 = vmul.f32 %v444, %v446
      %v448 = vadd.f32 %v444, %v447
      %vm449 = vweird.f32 %v444
      %v450 = vsel %vm449, %v444, %v448
      %v451 = vmul.f32 %v443, %v450
      %v452 = vadd.f32 %v451, 1e-05
      %v453 = vrsqrt.pop %v452
      %v454 = vmul.f32 %v453, %v452
      %v455 = vmul.f32 %v454, %v453
      %v456 = vmul.f32 0.5, %v455
      %v457 = vsub.f32 1.5, %v456
      %v458 = vmul.f32 %v453, %v457
      %vm459 = vweird.f32 %v452
      %vm460 = vweird.f32 %v453
      %vm461 = vmor %vm459, %vm460
      %v462 = vsel %vm461, %v453, %v458
      %v463 = vmul.f32 %v437, %v462
      %v465 = vperm.slane %v438, 0
      %v467 = vmul.f32 %v463, %v465
      %v468 = vpack.c.bf16 %v467, %v467
      %v469 = vld [vmem:[%s2] sm:$0xff]
      %v470 = vld [vmem:[%s2 + $0x8] sm:$0xff]
      %v471 = vld [vmem:[%s2 + $0x10] sm:$0xff]
      %v472 = vld [vmem:[%s2 + $0x18] sm:$0xff]
      %v473 = vpack.c.bf16 %v470, %v469
      %v474 = vpack.c.bf16 %v472, %v471
      %v476 = vsel %vm440, %v468, 0
      %v479 = vsel %vm440, %v473, 0
      %v482 = vsel %vm440, %v474, 0
      %484 = vmatpush.bf16.xpose.msra.mxu0 0
      %485 = vmatpush.bf16.xpose.msra.mxu0 0
      %486 = vmatpush.bf16.xpose.msra.mxu0 0
      %487 = vmatpush.bf16.xpose.msra.mxu0 0
      %488 = vmatpush.bf16.xpose.msra.mxu0 0
      %489 = vmatpush.bf16.xpose.msra.mxu0 0
      %490 = vmatpush.bf16.xpose.msra.mxu0 %v482
      %491 = vmatpush.bf16.xpose.msra.mxu0 %v479
      %492 = vmatmul.bf16.gmra.mxu0 %v476
      %v493 = vpop.f32.mrf.mxu0
      %v494 = vadd.f32 0.0, %v493
      %v495 = vpop.f32.mrf.mxu0
      %496 = vdwg.mxu0
      %v497 = vld [vmem:[%s3] sm:$0xff]
      %v498 = vld [vmem:[%s3 + $0x8] sm:$0xff]
      %v499 = vld [vmem:[%s3 + $0x10] sm:$0xff]
      %v500 = vld [vmem:[%s3 + $0x18] sm:$0xff]
      %v501 = vpack.c.bf16 %v498, %v497
      %v502 = vpack.c.bf16 %v500, %v499
      %v504 = vsel %vm440, %v501, 0
      %v507 = vsel %vm440, %v502, 0
      %509 = vmatpush.bf16.xpose.msra.mxu0 0
      %510 = vmatpush.bf16.xpose.msra.mxu0 0
      %511 = vmatpush.bf16.xpose.msra.mxu0 0
      %512 = vmatpush.bf16.xpose.msra.mxu0 0
      %513 = vmatpush.bf16.xpose.msra.mxu0 0
      %514 = vmatpush.bf16.xpose.msra.mxu0 0
      %515 = vmatpush.bf16.xpose.msra.mxu0 %v507
      %516 = vmatpush.bf16.xpose.msra.mxu0 %v504
      %517 = vmatmul.bf16.gmra.mxu0 %v476
      %v518 = vpop.f32.mrf.mxu0
      %v519 = vadd.f32 0.0, %v518
      %v520 = vpop.f32.mrf.mxu0
      %521 = vdwg.mxu0
      %v522 = vld [vmem:[%s4] sm:$0xff]
      %v523 = vld [vmem:[%s4 + $0x8] sm:$0xff]
      %v524 = vld [vmem:[%s4 + $0x10] sm:$0xff]
      %v525 = vld [vmem:[%s4 + $0x18] sm:$0xff]
      %v526 = vpack.c.bf16 %v523, %v522
      %v527 = vpack.c.bf16 %v525, %v524
      %v529 = vsel %vm440, %v526, 0
      %v532 = vsel %vm440, %v527, 0
      %534 = vmatpush.bf16.xpose.msra.mxu0 0
      %535 = vmatpush.bf16.xpose.msra.mxu0 0
      %536 = vmatpush.bf16.xpose.msra.mxu0 0
      %537 = vmatpush.bf16.xpose.msra.mxu0 0
      %538 = vmatpush.bf16.xpose.msra.mxu0 0
      %539 = vmatpush.bf16.xpose.msra.mxu0 0
      %540 = vmatpush.bf16.xpose.msra.mxu0 %v532
      %541 = vmatpush.bf16.xpose.msra.mxu0 %v529
      %542 = vmatmul.bf16.gmra.mxu0 %v476
      %v543 = vpop.f32.mrf.mxu0
      %v544 = vadd.f32 0.0, %v543
      %v545 = vpop.f32.mrf.mxu0
      %546 = vdwg.mxu0
      %v547 = vld [vmem:[%s10] sm:$0xff]
      %v548 = vld [vmem:[%s11] sm:$0xff]
      %v549 = vld [vmem:[%s12] sm:$0xff]
      %v550 = vld [vmem:[%s12 + $0x8] sm:$0xff]
      %v551 = vld [vmem:[%s12 + $0x10] sm:$0xff]
      %v552 = vld [vmem:[%s12 + $0x18] sm:$0xff]
      %v554 = vsel %vm440, %v494, 0
      %556 = vmatpush.msra.mxu0 0.0
      %557 = vmatpush.msra.mxu0 0.0
      %558 = vmatpush.msra.mxu0 0.0
      %559 = vmatpush.msra.mxu0 0.0
      %560 = vmatpush.msra.mxu0 0.0
      %561 = vmatpush.msra.mxu0 0.0
      %562 = vmatpush.msra.mxu0 0.0
      %563 = vmatpush.msra.mxu0 0.0
      %564 = vmatpush.msra.mxu0 0.0
      %565 = vmatpush.msra.mxu0 0.0
      %566 = vmatpush.msra.mxu0 0.0
      %567 = vmatpush.msra.mxu0 0.0
      %568 = vmatpush.msra.mxu0 %v552
      %569 = vmatpush.msra.mxu0 %v551
      %570 = vmatpush.msra.mxu0 %v550
      %571 = vmatpush.msra.mxu0 %v549
      %572 = vmatmul.f32.gmra.mxu0 %v554
      %v573 = vpop.f32.mrf.mxu0
      %v574 = vadd.f32 0.0, %v573
      %575 = vdwg.mxu0
      %v576 = vmul.f32 %v494, %v547
      %v577 = vmul.f32 %v574, %v548
      %v578 = vadd.f32 %v576, %v577
      %v580 = vsel %vm440, %v519, 0
      %582 = vmatpush.msra.mxu0 0.0
      %583 = vmatpush.msra.mxu0 0.0
      %584 = vmatpush.msra.mxu0 0.0
      %585 = vmatpush.msra.mxu0 0.0
      %586 = vmatpush.msra.mxu0 0.0
      %587 = vmatpush.msra.mxu0 0.0
      %588 = vmatpush.msra.mxu0 0.0
      %589 = vmatpush.msra.mxu0 0.0
      %590 = vmatpush.msra.mxu0 0.0
      %591 = vmatpush.msra.mxu0 0.0
      %592 = vmatpush.msra.mxu0 0.0
      %593 = vmatpush.msra.mxu0 0.0
      %594 = vmatpush.msra.mxu0 %v552
      %595 = vmatpush.msra.mxu0 %v551
      %596 = vmatpush.msra.mxu0 %v550
      %597 = vmatpush.msra.mxu0 %v549
      %598 = vmatmul.f32.gmra.mxu0 %v580
      %v599 = vpop.f32.mrf.mxu0
      %v600 = vadd.f32 0.0, %v599
      %601 = vdwg.mxu0
      %v602 = vmul.f32 %v519, %v547
      %v603 = vmul.f32 %v600, %v548
      %v604 = vadd.f32 %v602, %v603
      %v605 = vlaneseq
      %v606 = vshrl.u32 %v605, 7
      %v607 = vlaneseq
      %v608 = vand.u32 %v607, 127
      %vm609 = vcmp.le.s32.totalorder %v608, %v606
      %vm610 = vcmask 64512
      %v612 = vsel %vm610, %v578, 0
      %v615 = vsel %vm610, %v604, 0
      %617 = vmatpush.xpose.msra.mxu0 0.0
      %618 = vmatpush.xpose.msra.mxu0 0.0
      %619 = vmatpush.xpose.msra.mxu0 0.0
      %620 = vmatpush.xpose.msra.mxu0 0.0
      %621 = vmatpush.xpose.msra.mxu0 0.0
      %622 = vmatpush.xpose.msra.mxu0 0.0
      %623 = vmatpush.xpose.msra.mxu0 0.0
      %624 = vmatpush.xpose.msra.mxu0 0.0
      %625 = vmatpush.xpose.msra.mxu0 0.0
      %626 = vmatpush.xpose.msra.mxu0 0.0
      %627 = vmatpush.xpose.msra.mxu0 0.0
      %628 = vmatpush.xpose.msra.mxu0 0.0
      %629 = vmatpush.xpose.msra.mxu0 0.0
      %630 = vmatpush.xpose.msra.mxu0 0.0
      %631 = vmatpush.xpose.msra.mxu0 0.0
      %632 = vmatpush.xpose.msra.mxu0 %v615
      %633 = vmatmul.f32.gmra.mxu0 %v612
      %v634 = vpop.f32.mrf.mxu0
      %v635 = vadd.f32 0.0, %v634
      %636 = vdwg.mxu0
      %v637 = vmul.f32 %v635, 0.35355338
      %v638 = vsel %vm609, %v637, -inf
      %v639 = vsel %vm610, %v638, -inf
      %640 = vmax.xlane.f32.xlu0 %v639
      %v641 = vpop.xlane.xlu0 %640
      %v642 = vsub.f32 %v638, %v641
      %v643 = vmul.f32 %v642, 1.442695
      %v644 = vpow.pop %v643
      %v645 = vsel %vm610, %v644, 0.0
      %646 = vadd.xlane.f32.xlu0 %v645
      %v647 = vpop.xlane.xlu0 %646
      %v648 = vrcp.pop %v647
      %v649 = vmul.f32 %v644, %v648
      %v651 = vsel %vm610, %v649, 0
      %653 = vmatpush.msra.mxu0 0.0
      %654 = vmatpush.msra.mxu0 0.0
      %655 = vmatpush.msra.mxu0 0.0
      %656 = vmatpush.msra.mxu0 0.0
      %657 = vmatpush.msra.mxu0 0.0
      %658 = vmatpush.msra.mxu0 0.0
      %659 = vmatpush.msra.mxu0 0.0
      %660 = vmatpush.msra.mxu0 0.0
      %661 = vmatpush.msra.mxu0 0.0
      %662 = vmatpush.msra.mxu0 0.0
      %663 = vmatpush.msra.mxu0 0.0
      %664 = vmatpush.msra.mxu0 0.0
      %665 = vmatpush.msra.mxu0 0.0
      %666 = vmatpush.msra.mxu0 0.0
      %667 = vmatpush.msra.mxu0 0.0
      %668 = vmatpush.msra.mxu0 %v544
      %669 = vmatmul.f32.gmra.mxu0 %v651
      %v670 = vpop.f32.mrf.mxu0
      %v671 = vadd.f32 0.0, %v670
      %672 = vdwg.mxu0
      %673 = vrot.lane.b32.xlu0 %v578, 120
      %v674 = vpop.permute.xlu0 %673
      %675 = vrot.lane.b32.xlu0 %v604, 120
      %v676 = vpop.permute.xlu0 %675
      %v677 = vsel %vm610, %v674, 0
      %v679 = vsel %vm610, %v676, 0
      %681 = vmatpush.xpose.msra.mxu0 0.0
      %682 = vmatpush.xpose.msra.mxu0 0.0
      %683 = vmatpush.xpose.msra.mxu0 0.0
      %684 = vmatpush.xpose.msra.mxu0 0.0
      %685 = vmatpush.xpose.msra.mxu0 0.0
      %686 = vmatpush.xpose.msra.mxu0 0.0
      %687 = vmatpush.xpose.msra.mxu0 0.0
      %688 = vmatpush.xpose.msra.mxu0 0.0
      %689 = vmatpush.xpose.msra.mxu0 0.0
      %690 = vmatpush.xpose.msra.mxu0 0.0
      %691 = vmatpush.xpose.msra.mxu0 0.0
      %692 = vmatpush.xpose.msra.mxu0 0.0
      %693 = vmatpush.xpose.msra.mxu0 0.0
      %694 = vmatpush.xpose.msra.mxu0 0.0
      %695 = vmatpush.xpose.msra.mxu0 0.0
      %696 = vmatpush.xpose.msra.mxu0 %v679
      %697 = vmatmul.f32.gmra.mxu0 %v677
      %v698 = vpop.f32.mrf.mxu0
      %v699 = vadd.f32 0.0, %v698
      %700 = vdwg.mxu0
      %v701 = vmul.f32 %v699, 0.35355338
      %v702 = vsel %vm609, %v701, -inf
      %v703 = vsel %vm610, %v702, -inf
      %704 = vmax.xlane.f32.xlu0 %v703
      %v705 = vpop.xlane.xlu0 %704
      %v706 = vsub.f32 %v702, %v705
      %v707 = vmul.f32 %v706, 1.442695
      %v708 = vpow.pop %v707
      %v709 = vsel %vm610, %v708, 0.0
      %710 = vadd.xlane.f32.xlu0 %v709
      %v711 = vpop.xlane.xlu0 %710
      %v712 = vrcp.pop %v711
      %v713 = vmul.f32 %v708, %v712
      %715 = vrot.lane.b32.xlu0 %v544, 120
      %v716 = vpop.permute.xlu0 %715
      %v719 = vsel %vm610, %v713, 0
      %721 = vmatpush.msra.mxu0 0.0
      %722 = vmatpush.msra.mxu0 0.0
      %723 = vmatpush.msra.mxu0 0.0
      %724 = vmatpush.msra.mxu0 0.0
      %725 = vmatpush.msra.mxu0 0.0
      %726 = vmatpush.msra.mxu0 0.0
      %727 = vmatpush.msra.mxu0 0.0
      %728 = vmatpush.msra.mxu0 0.0
      %729 = vmatpush.msra.mxu0 0.0
      %730 = vmatpush.msra.mxu0 0.0
      %731 = vmatpush.msra.mxu0 0.0
      %732 = vmatpush.msra.mxu0 0.0
      %733 = vmatpush.msra.mxu0 0.0
      %734 = vmatpush.msra.mxu0 0.0
      %735 = vmatpush.msra.mxu0 0.0
      %736 = vmatpush.msra.mxu0 %v716
      %737 = vmatmul.f32.gmra.mxu0 %v719
      %v738 = vpop.f32.mrf.mxu0
      %v739 = vadd.f32 0.0, %v738
      %740 = vdwg.mxu0
      %741 = vrot.lane.b32.xlu0 %v578, 112
      %v742 = vpop.permute.xlu0 %741
      %743 = vrot.lane.b32.xlu0 %v604, 112
      %v744 = vpop.permute.xlu0 %743
      %v745 = vsel %vm610, %v742, 0
      %v747 = vsel %vm610, %v744, 0
      %749 = vmatpush.xpose.msra.mxu0 0.0
      %750 = vmatpush.xpose.msra.mxu0 0.0
      %751 = vmatpush.xpose.msra.mxu0 0.0
      %752 = vmatpush.xpose.msra.mxu0 0.0
      %753 = vmatpush.xpose.msra.mxu0 0.0
      %754 = vmatpush.xpose.msra.mxu0 0.0
      %755 = vmatpush.xpose.msra.mxu0 0.0
      %756 = vmatpush.xpose.msra.mxu0 0.0
      %757 = vmatpush.xpose.msra.mxu0 0.0
      %758 = vmatpush.xpose.msra.mxu0 0.0
      %759 = vmatpush.xpose.msra.mxu0 0.0
      %760 = vmatpush.xpose.msra.mxu0 0.0
      %761 = vmatpush.xpose.msra.mxu0 0.0
      %762 = vmatpush.xpose.msra.mxu0 0.0
      %763 = vmatpush.xpose.msra.mxu0 0.0
      %764 = vmatpush.xpose.msra.mxu0 %v747
      %765 = vmatmul.f32.gmra.mxu0 %v745
      %v766 = vpop.f32.mrf.mxu0
      %v767 = vadd.f32 0.0, %v766
      %768 = vdwg.mxu0
      %v769 = vmul.f32 %v767, 0.35355338
      %v770 = vsel %vm609, %v769, -inf
      %v771 = vsel %vm610, %v770, -inf
      %772 = vmax.xlane.f32.xlu0 %v771
      %v773 = vpop.xlane.xlu0 %772
      %v774 = vsub.f32 %v770, %v773
      %v775 = vmul.f32 %v774, 1.442695
      %v776 = vpow.pop %v775
      %v777 = vsel %vm610, %v776, 0.0
      %778 = vadd.xlane.f32.xlu0 %v777
      %v779 = vpop.xlane.xlu0 %778
      %v780 = vrcp.pop %v779
      %v781 = vmul.f32 %v776, %v780
      %782 = vrot.lane.b32.xlu0 %v544, 112
      %v783 = vpop.permute.xlu0 %782
      %v786 = vsel %vm610, %v781, 0
      %788 = vmatpush.msra.mxu0 0.0
      %789 = vmatpush.msra.mxu0 0.0
      %790 = vmatpush.msra.mxu0 0.0
      %791 = vmatpush.msra.mxu0 0.0
      %792 = vmatpush.msra.mxu0 0.0
      %793 = vmatpush.msra.mxu0 0.0
      %794 = vmatpush.msra.mxu0 0.0
      %795 = vmatpush.msra.mxu0 0.0
      %796 = vmatpush.msra.mxu0 0.0
      %797 = vmatpush.msra.mxu0 0.0
      %798 = vmatpush.msra.mxu0 0.0
      %799 = vmatpush.msra.mxu0 0.0
      %800 = vmatpush.msra.mxu0 0.0
      %801 = vmatpush.msra.mxu0 0.0
      %802 = vmatpush.msra.mxu0 0.0
      %803 = vmatpush.msra.mxu0 %v783
      %804 = vmatmul.f32.gmra.mxu0 %v786
      %v805 = vpop.f32.mrf.mxu0
      %v806 = vadd.f32 0.0, %v805
      %807 = vdwg.mxu0
      %808 = vrot.lane.b32.xlu0 %v578, 104
      %v809 = vpop.permute.xlu0 %808
      %810 = vrot.lane.b32.xlu0 %v604, 104
      %v811 = vpop.permute.xlu0 %810
      %v812 = vsel %vm610, %v809, 0
      %v814 = vsel %vm610, %v811, 0
      %816 = vmatpush.xpose.msra.mxu0 0.0
      %817 = vmatpush.xpose.msra.mxu0 0.0
      %818 = vmatpush.xpose.msra.mxu0 0.0
      %819 = vmatpush.xpose.msra.mxu0 0.0
      %820 = vmatpush.xpose.msra.mxu0 0.0
      %821 = vmatpush.xpose.msra.mxu0 0.0
      %822 = vmatpush.xpose.msra.mxu0 0.0
      %823 = vmatpush.xpose.msra.mxu0 0.0
      %824 = vmatpush.xpose.msra.mxu0 0.0
      %825 = vmatpush.xpose.msra.mxu0 0.0
      %826 = vmatpush.xpose.msra.mxu0 0.0
      %827 = vmatpush.xpose.msra.mxu0 0.0
      %828 = vmatpush.xpose.msra.mxu0 0.0
      %829 = vmatpush.xpose.msra.mxu0 0.0
      %830 = vmatpush.xpose.msra.mxu0 0.0
      %831 = vmatpush.xpose.msra.mxu0 %v814
      %832 = vmatmul.f32.gmra.mxu0 %v812
      %v833 = vpop.f32.mrf.mxu0
      %v834 = vadd.f32 0.0, %v833
      %835 = vdwg.mxu0
      %v836 = vmul.f32 %v834, 0.35355338
      %v837 = vsel %vm609, %v836, -inf
      %v838 = vsel %vm610, %v837, -inf
      %839 = vmax.xlane.f32.xlu0 %v838
      %v840 = vpop.xlane.xlu0 %839
      %v841 = vsub.f32 %v837, %v840
      %v842 = vmul.f32 %v841, 1.442695
      %v843 = vpow.pop %v842
      %v844 = vsel %vm610, %v843, 0.0
      %845 = vadd.xlane.f32.xlu0 %v844
      %v846 = vpop.xlane.xlu0 %845
      %v847 = vrcp.pop %v846
      %v848 = vmul.f32 %v843, %v847
      %849 = vrot.lane.b32.xlu0 %v544, 104
      %v850 = vpop.permute.xlu0 %849
      %v853 = vsel %vm610, %v848, 0
      %855 = vmatpush.msra.mxu0 0.0
      %856 = vmatpush.msra.mxu0 0.0
      %857 = vmatpush.msra.mxu0 0.0
      %858 = vmatpush.msra.mxu0 0.0
      %859 = vmatpush.msra.mxu0 0.0
      %860 = vmatpush.msra.mxu0 0.0
      %861 = vmatpush.msra.mxu0 0.0
      %862 = vmatpush.msra.mxu0 0.0
      %863 = vmatpush.msra.mxu0 0.0
      %864 = vmatpush.msra.mxu0 0.0
      %865 = vmatpush.msra.mxu0 0.0
      %866 = vmatpush.msra.mxu0 0.0
      %867 = vmatpush.msra.mxu0 0.0
      %868 = vmatpush.msra.mxu0 0.0
      %869 = vmatpush.msra.mxu0 0.0
      %870 = vmatpush.msra.mxu0 %v850
      %871 = vmatmul.f32.gmra.mxu0 %v853
      %v872 = vpop.f32.mrf.mxu0
      %v873 = vadd.f32 0.0, %v872
      %874 = vdwg.mxu0
      %876 = vrot.lane.b32.xlu0 %v739, 8
      %v877 = vpop.permute.xlu0 %876
      %880 = vrot.lane.b32.xlu0 %v806, 16
      %v881 = vpop.permute.xlu0 %880
      %884 = vrot.lane.b32.xlu0 %v873, 24
      %v885 = vpop.permute.xlu0 %884
      %v887 = vsel %vm610, %v671, %v877
      %vm888 = vcmask 130048
      %v889 = vsel %vm888, %v887, %v881
      %vm890 = vcmask 195584
      %v891 = vsel %vm890, %v889, %v885
      %v892 = vpack.c.bf16 %v891, %v891
      %v893 = vld [vmem:[%s5] sm:$0xff]
      %v894 = vld [vmem:[%s5 + $0x8] sm:$0xff]
      %v895 = vld [vmem:[%s5 + $0x10] sm:$0xff]
      %v896 = vld [vmem:[%s5 + $0x18] sm:$0xff]
      %v897 = vpack.c.bf16 %v894, %v893
      %v898 = vpack.c.bf16 %v896, %v895
      %v900 = vsel %vm440, %v892, 0
      %v903 = vsel %vm440, %v897, 0
      %v906 = vsel %vm440, %v898, 0
      %908 = vmatpush.bf16.xpose.msra.mxu0 0
      %909 = vmatpush.bf16.xpose.msra.mxu0 0
      %910 = vmatpush.bf16.xpose.msra.mxu0 0
      %911 = vmatpush.bf16.xpose.msra.mxu0 0
      %912 = vmatpush.bf16.xpose.msra.mxu0 0
      %913 = vmatpush.bf16.xpose.msra.mxu0 0
      %914 = vmatpush.bf16.xpose.msra.mxu0 %v906
      %915 = vmatpush.bf16.xpose.msra.mxu0 %v903
      %916 = vmatmul.bf16.gmra.mxu0 %v900
      %v917 = vpop.f32.mrf.mxu0
      %v918 = vadd.f32 0.0, %v917
      %v919 = vpop.f32.mrf.mxu0
      %920 = vdwg.mxu0
      %v921 = vadd.f32 %v437, %v918
      %v922 = vld [vmem:[%s6] sm:$0x1]
      %v923 = vmul.f32 %v921, %v921
      %v924 = vsel %vm440, %v923, 0.0
      %925 = vadd.xlane.f32.xlu0 %v924
      %v926 = vpop.xlane.xlu0 %925
      %v927 = vmul.f32 %v926, %v450
      %v928 = vadd.f32 %v927, 1e-05
      %v929 = vrsqrt.pop %v928
      %v930 = vmul.f32 %v929, %v928
      %v931 = vmul.f32 %v930, %v929
      %v932 = vmul.f32 0.5, %v931
      %v933 = vsub.f32 1.5, %v932
      %v934 = vmul.f32 %v929, %v933
      %vm935 = vweird.f32 %v928
      %vm936 = vweird.f32 %v929
      %vm937 = vmor %vm935, %vm936
      %v938 = vsel %vm937, %v929, %v934
      %v939 = vmul.f32 %v921, %v938
      %v941 = vperm.slane %v922, 0
      %v943 = vmul.f32 %v939, %v941
      %v944 = vpack.c.bf16 %v943, %v943
      %v945 = vld [vmem:[%s7] sm:$0xff]
      %v946 = vld [vmem:[%s7 + $0x8] sm:$0xff]
      %v947 = vld [vmem:[%s7 + $0x10] sm:$0xff]
      %v948 = vld [vmem:[%s7 + $0x18] sm:$0xff]
      %v949 = vld [vmem:[%s7 + $0x20] sm:$0xff]
      %v950 = vld [vmem:[%s7 + $0x28] sm:$0xff]
      %v951 = vld [vmem:[%s7 + $0x30] sm:$0xff]
      %v952 = vld [vmem:[%s7 + $0x38] sm:$0xff]
      %v953 = vld [vmem:[%s7 + $0x40] sm:$0xff]
      %v954 = vld [vmem:[%s7 + $0x48] sm:$0xff]
      %v955 = vld [vmem:[%s7 + $0x50] sm:$0xff]
      %v956 = vld [vmem:[%s7 + $0x58] sm:$0xff]
      %v957 = vpack.c.bf16 %v946, %v945
      %v958 = vpack.c.bf16 %v948, %v947
      %v959 = vpack.c.bf16 %v950, %v949
      %v960 = vpack.c.bf16 %v952, %v951
      %v961 = vpack.c.bf16 %v954, %v953
      %v962 = vpack.c.bf16 %v956, %v955
      %v964 = vsel %vm440, %v944, 0
      %v967 = vsel %vm440, %v957, 0
      %v970 = vsel %vm440, %v958, 0
      %v973 = vsel %vm440, %v959, 0
      %v976 = vsel %vm440, %v960, 0
      %v979 = vsel %vm440, %v961, 0
      %v982 = vsel %vm440, %v962, 0
      %984 = vmatpush.bf16.xpose.msra.mxu0 0
      %985 = vmatpush.bf16.xpose.msra.mxu0 0
      %986 = vmatpush.bf16.xpose.msra.mxu0 %v982
      %987 = vmatpush.bf16.xpose.msra.mxu0 %v979
      %988 = vmatpush.bf16.xpose.msra.mxu0 %v976
      %989 = vmatpush.bf16.xpose.msra.mxu0 %v973
      %990 = vmatpush.bf16.xpose.msra.mxu0 %v970
      %991 = vmatpush.bf16.xpose.msra.mxu0 %v967
      %992 = vmatmul.bf16.gmra.mxu0 %v964
      %v993 = vpop.f32.mrf.mxu0
      %v994 = vadd.f32 0.0, %v993
      %v995 = vpop.f32.mrf.mxu0
      %996 = vdwg.mxu0
      %v997 = vld [vmem:[%s8] sm:$0xff]
      %v998 = vld [vmem:[%s8 + $0x8] sm:$0xff]
      %v999 = vld [vmem:[%s8 + $0x10] sm:$0xff]
      %v1000 = vld [vmem:[%s8 + $0x18] sm:$0xff]
      %v1001 = vld [vmem:[%s8 + $0x20] sm:$0xff]
      %v1002 = vld [vmem:[%s8 + $0x28] sm:$0xff]
      %v1003 = vld [vmem:[%s8 + $0x30] sm:$0xff]
      %v1004 = vld [vmem:[%s8 + $0x38] sm:$0xff]
      %v1005 = vld [vmem:[%s8 + $0x40] sm:$0xff]
      %v1006 = vld [vmem:[%s8 + $0x48] sm:$0xff]
      %v1007 = vld [vmem:[%s8 + $0x50] sm:$0xff]
      %v1008 = vld [vmem:[%s8 + $0x58] sm:$0xff]
      %v1009 = vpack.c.bf16 %v998, %v997
      %v1010 = vpack.c.bf16 %v1000, %v999
      %v1011 = vpack.c.bf16 %v1002, %v1001
      %v1012 = vpack.c.bf16 %v1004, %v1003
      %v1013 = vpack.c.bf16 %v1006, %v1005
      %v1014 = vpack.c.bf16 %v1008, %v1007
      %v1016 = vsel %vm440, %v1009, 0
      %v1019 = vsel %vm440, %v1010, 0
      %v1022 = vsel %vm440, %v1011, 0
      %v1025 = vsel %vm440, %v1012, 0
      %v1028 = vsel %vm440, %v1013, 0
      %v1031 = vsel %vm440, %v1014, 0
      %1033 = vmatpush.bf16.xpose.msra.mxu0 0
      %1034 = vmatpush.bf16.xpose.msra.mxu0 0
      %1035 = vmatpush.bf16.xpose.msra.mxu0 %v1031
      %1036 = vmatpush.bf16.xpose.msra.mxu0 %v1028
      %1037 = vmatpush.bf16.xpose.msra.mxu0 %v1025
      %1038 = vmatpush.bf16.xpose.msra.mxu0 %v1022
      %1039 = vmatpush.bf16.xpose.msra.mxu0 %v1019
      %1040 = vmatpush.bf16.xpose.msra.mxu0 %v1016
      %1041 = vmatmul.bf16.gmra.mxu0 %v964
      %v1042 = vpop.f32.mrf.mxu0
      %v1043 = vadd.f32 0.0, %v1042
      %v1044 = vpop.f32.mrf.mxu0
      %1045 = vdwg.mxu0
      %v1046 = vsub.f32 0.0, %v994
      %v1047 = vmul.f32 %v1046, 1.442695
      %v1048 = vpow.pop %v1047
      %v1049 = vadd.f32 %v1048, 1.0
      %v1050 = vrcp.pop %v1049
      %v1051 = vmul.f32 %v994, %v1050
      %v1052 = vmul.f32 %v1051, %v1043
      %v1053 = vpack.c.bf16 %v1052, %v1052
      %v1054 = vld [vmem:[%s9] sm:$0xff]
      %v1055 = vld [vmem:[%s9 + $0x8] sm:$0xff]
      %v1056 = vld [vmem:[%s9 + $0x10] sm:$0xff]
      %v1057 = vld [vmem:[%s9 + $0x18] sm:$0xff]
      %v1058 = vpack.c.bf16 %v1055, %v1054
      %v1059 = vpack.c.bf16 %v1057, %v1056
      %vm1060 = vcmask 785408
      %v1062 = vsel %vm1060, %v1053, 0
      %v1065 = vsel %vm1060, %v1058, 0
      %v1068 = vsel %vm1060, %v1059, 0
      %1070 = vmatpush.bf16.xpose.msra.mxu0 0
      %1071 = vmatpush.bf16.xpose.msra.mxu0 0
      %1072 = vmatpush.bf16.xpose.msra.mxu0 0
      %1073 = vmatpush.bf16.xpose.msra.mxu0 0
      %1074 = vmatpush.bf16.xpose.msra.mxu0 0
      %1075 = vmatpush.bf16.xpose.msra.mxu0 0
      %1076 = vmatpush.bf16.xpose.msra.mxu0 %v1068
      %1077 = vmatpush.bf16.xpose.msra.mxu0 %v1065
      %1078 = vmatmul.bf16.gmra.mxu0 %v1062
      %v1079 = vpop.f32.mrf.mxu0
      %v1080 = vadd.f32 0.0, %v1079
      %v1081 = vpop.f32.mrf.mxu0
      %1082 = vdwg.mxu0
      %v1083 = vadd.f32 %v921, %v1080
      %1084 = vst.msk [vmem:[%s435] sm:$0xff] %vm440, %v1083
      %p1085 = scmp.lt.s32.totalorder %s24, 1
      %s1086 = scalar_select %p1085, %s24, 1
      %s1087 = smul.addr %s1086, 8
      %s1088 = scalar_lea.vmem %s13, %s1087
      // Predicated region
      $region73: #{forward.4} parent=71 // pred_check
        %p1089 = pneg %p320
      $region74: #{forward.4} parent=71 // pred_check_branch
        %1091 = sbr.rel (%p1089) target = $region76
      $region75: #{forward.4} parent=71 // pred_region
        _
      $region76: #{forward.4} parent=71 // pred_fallthru
        _
    $region72: #{forward.4} parent=5 // pred_fallthru
      _
    %p1092 = scmp.le.s32.totalorder 2, %s19
    // Predicated region
    $region77: #{forward.4} parent=5 // pred_check
      %p1093 = pneg %p1092
    $region78: #{forward.4} parent=5 // pred_check_branch
      %1095 = sbr.rel (%p1093) target = $region80
    $region79: #{forward.4} parent=5 // pred_region
      %s1096 = ssub.s32 %s19, 2
      // Predicated region
      $region81: #{forward.4} parent=79 // pred_check
        %p1097 = pneg %p326
      $region82: #{forward.4} parent=79 // pred_check_branch
        %1099 = sbr.rel (%p1097) target = $region84
      $region83: #{forward.4} parent=79 // pred_region
        %p1100 = scmp.lt.s32.totalorder %s25, 1
        %s1101 = scalar_select %p1100, %s25, 1
        %s1102 = smul.addr %s1101, 8
        %s1103 = scalar_lea.vmem %s13, %s1102
      $region84: #{forward.4} parent=79 // pred_fallthru
        _
    $region80: #{forward.4} parent=5 // pred_fallthru
      _
  $region6: #{forward.4} parent=0 // loop_footer
    %s23 = sadd.s32 1, %s19
  $region7: #{forward.4} parent=0 // loop_footer_branch
    %18 = sbr.rel target = $region3
  $region8: #{forward.4} parent=0 // loop_exit
    _

</llo_original>
